<compile_context>
chip_gen: v7x
topology: tpu7x:2x2x1
jax: 0.10.0
libtpu: 0.0.40
codegen_flags: <defaults>
</compile_context>

<pallas_src>
import jax
import jax.numpy as jnp
from jax import lax
from jax.experimental import pallas as pl
from jax.experimental.pallas import tpu as pltpu

# ---- config (matches the PyTorch module's config) --------------------------------
HIDDEN = 32            # config.hidden_dim
HEADS = 4              # config.num_heads
DIM_HEAD = HIDDEN // HEADS
MLP = 64               # config.mlp_dim
DROPOUT = 0.0          # eval-mode dropout == identity
SEQ = 8
BATCH = 2
EPS = 1e-5             # nn.LayerNorm default eps
SCALE = DIM_HEAD ** (-0.5)
NEG_BIG = -1e30        # masks cross-batch attention entries
SLAB_W = 128           # lane-dense packed-parameter slab width


def _gelu_exact(x):
    # nn.GELU() default = exact erf formulation (VALU polynomial; plenty of slack here)
    return 0.5 * x * (1.0 + lax.erf(x / jnp.sqrt(2.0).astype(x.dtype)))


def _layernorm(x, gamma, beta):
    mu = jnp.mean(x, axis=-1, keepdims=True)
    var = jnp.mean((x - mu) ** 2, axis=-1, keepdims=True)
    return (x - mu) * lax.rsqrt(var + EPS) * gamma + beta


def self_attn_block_kernel(x_ref, wqkv_ref, slab_ref, o_ref):
    BN, D = x_ref.shape                                # [B*N, D] = [16, 32]
    H, dh, M = HEADS, DIM_HEAD, MLP
    x = x_ref[...]

    # ---- unpack the packed parameter slab (static slices, all starting at lane 0) --
    w_out = slab_ref[0:D, :D]                          # [D, D]
    w1 = slab_ref[D:2 * D, :M]                         # [D, MLP]
    w2 = slab_ref[2 * D:2 * D + M, :D]                 # [MLP, D]
    mask_row = 2 * D + M
    bias = slab_ref[mask_row:mask_row + BN, :BN]       # [BN, BN] block-diag additive mask
    vr = mask_row + BN
    ln1_g = slab_ref[vr + 0:vr + 1, :D]
    ln1_b = slab_ref[vr + 1:vr + 2, :D]
    b_out = slab_ref[vr + 2:vr + 3, :D]
    ln2_g = slab_ref[vr + 3:vr + 4, :D]
    ln2_b = slab_ref[vr + 4:vr + 5, :D]
    b2 = slab_ref[vr + 5:vr + 6, :D]
    b1 = slab_ref[vr + 6:vr + 7, :M]

    # ---- PreNorm + Attention ------------------------------------------------------
    xn = _layernorm(x, ln1_g, ln1_b)                   # [BN, D]

    # single fused QKV projection (SCALE already folded into the Q columns)
    qkv = jnp.dot(xn, wqkv_ref[...],
                  preferred_element_type=jnp.float32)  # [BN, 3D]

    head_outs = []
    for h in range(H):                                 # static unroll, H = 4
        sl = slice(h * dh, (h + 1) * dh)
        q_h = qkv[:, 0 * D + h * dh:0 * D + (h + 1) * dh]        # [BN, dh]
        k_h = qkv[:, 1 * D + h * dh:1 * D + (h + 1) * dh]
        v_h = qkv[:, 2 * D + h * dh:2 * D + (h + 1) * dh]
        del sl

        dots = jnp.einsum('ne,me->nm', q_h, k_h,
                          preferred_element_type=jnp.float32)    # [BN, BN]
        dots = dots + bias                                       # block-diag per-batch mask
        dots = dots - jnp.max(dots, axis=-1, keepdims=True)
        p = jnp.exp(dots)
        attn = p * pl.reciprocal(jnp.sum(p, axis=-1, keepdims=True), approx=True)
        head_outs.append(jnp.dot(attn, v_h,
                                 preferred_element_type=jnp.float32))  # [BN, dh]

    # head merge (lane concat) fused with the output projection: one K=32 matmul
    out_merged = jnp.concatenate(head_outs, axis=-1)             # [BN, D]
    attn_out = jnp.dot(out_merged, w_out,
                       preferred_element_type=jnp.float32) + b_out
    # nn.Dropout is identity in eval mode (config.dropout only matters at train time).
    x1 = x + attn_out                                            # residual 1

    # ---- PreNorm + FeedForward ----------------------------------------------------
    xn2 = _layernorm(x1, ln2_g, ln2_b)
    h1 = _gelu_exact(jnp.dot(xn2, w1,
                             preferred_element_type=jnp.float32) + b1)   # [BN, MLP]
    ffn = jnp.dot(h1, w2, preferred_element_type=jnp.float32) + b2

    o_ref[...] = (x1 + ffn).astype(o_ref.dtype)                  # residual 2


def _prepare_params(params, batch, seq):
    """Host/XLA-side (outside the kernel) one-time weight re-layout + packing."""
    ln1_g, ln1_b, w_qkv, w_out, b_out, ln2_g, ln2_b, w1, b1, w2, b2 = params
    D, M = HIDDEN, MLP
    BN = batch * seq

    # fused QKV weight [D, 3D]; attention scale folded into the Q columns
    wqkv = jnp.concatenate([w_qkv[:, :D] * SCALE, w_qkv[:, D:]], axis=1)

    # precomputed block-diagonal additive mask: tokens attend only within their batch
    row_b = jnp.arange(BN, dtype=jnp.int32)[:, None] // seq
    col_b = jnp.arange(BN, dtype=jnp.int32)[None, :] // seq
    bias = jnp.where(row_b == col_b, 0.0, NEG_BIG).astype(jnp.float32)

    mask_row = 2 * D + M
    vec_row = mask_row + BN
    rows = ((vec_row + 7 + 7) // 8) * 8                # 7 vector rows, round up to 8

    slab = jnp.zeros((rows, SLAB_W), jnp.float32)
    slab = slab.at[0:D, :D].set(w_out)
    slab = slab.at[D:2 * D, :M].set(w1)
    slab = slab.at[2 * D:2 * D + M, :D].set(w2)
    slab = slab.at[mask_row:mask_row + BN, :BN].set(bias)
    slab = slab.at[vec_row + 0, :D].set(ln1_g.reshape(D))
    slab = slab.at[vec_row + 1, :D].set(ln1_b.reshape(D))
    slab = slab.at[vec_row + 2, :D].set(b_out.reshape(D))
    slab = slab.at[vec_row + 3, :D].set(ln2_g.reshape(D))
    slab = slab.at[vec_row + 4, :D].set(ln2_b.reshape(D))
    slab = slab.at[vec_row + 5, :D].set(b2.reshape(D))
    slab = slab.at[vec_row + 6, :M].set(b1.reshape(M))
    return wqkv, slab


def self_attention_block(x, params):
    B, N, D = x.shape
    BN = B * N
    wqkv, slab = _prepare_params(params, B, N)
    x2 = x.reshape(BN, D)                              # free metadata reshape in XLA

    out2 = pl.pallas_call(
        self_attn_block_kernel,
        out_shape=jax.ShapeDtypeStruct((BN, D), x.dtype),
        grid_spec=pltpu.PrefetchScalarGridSpec(
            num_scalar_prefetch=0,
            grid=(1,),                                 # whole problem in one step
            in_specs=[
                pl.BlockSpec((BN, D), lambda i: (0, 0)),         # x (flattened)
                pl.BlockSpec(wqkv.shape, lambda i: (0, 0)),      # fused QKV weights
                pl.BlockSpec(slab.shape, lambda i: (0, 0)),      # packed param slab
            ],
            out_specs=pl.BlockSpec((BN, D), lambda i: (0, 0)),
        ),
        compiler_params=pltpu.CompilerParams(
            dimension_semantics=("arbitrary",)),
    )(x2, wqkv, slab)
    return out2.reshape(B, N, D)


# ---- pure-JAX reference (for validation) ------------------------------------------
def reference(x, params):
    ln1_g, ln1_b, w_qkv, w_out, b_out, ln2_g, ln2_b, w1, b1, w2, b2 = params

    def ln(t, g, b):
        mu = jnp.mean(t, -1, keepdims=True)
        var = jnp.mean((t - mu) ** 2, -1, keepdims=True)
        return (t - mu) / jnp.sqrt(var + EPS) * g + b

    xn = ln(x, ln1_g, ln1_b)
    qkv = xn @ w_qkv
    q, k, v = jnp.split(qkv, 3, axis=-1)
    B, N, D = x.shape
    reshape_heads = lambda t: t.reshape(B, N, HEADS, DIM_HEAD).transpose(0, 2, 1, 3)
    q, k, v = map(reshape_heads, (q, k, v))
    dots = jnp.einsum('bhnd,bhmd->bhnm', q, k) * SCALE
    attn = jax.nn.softmax(dots, axis=-1)
    out = jnp.einsum('bhnm,bhmd->bhnd', attn, v)
    out = out.transpose(0, 2, 1, 3).reshape(B, N, D)
    x1 = x + (out @ w_out + b_out)
    xn2 = ln(x1, ln2_g, ln2_b)
    h1 = jax.nn.gelu(xn2 @ w1 + b1, approximate=False)
    return x1 + (h1 @ w2 + b2)


def init_params(key):
    ks = jax.random.split(key, 8)
    s = 0.02
    ln1_g = jnp.ones((1, HIDDEN), jnp.float32)
    ln1_b = jnp.zeros((1, HIDDEN), jnp.float32)
    w_qkv = s * jax.random.normal(ks[0], (HIDDEN, 3 * HIDDEN), jnp.float32)
    w_out = s * jax.random.normal(ks[1], (HIDDEN, HIDDEN), jnp.float32)
    b_out = s * jax.random.normal(ks[2], (1, HIDDEN), jnp.float32)
    ln2_g = jnp.ones((1, HIDDEN), jnp.float32)
    ln2_b = jnp.zeros((1, HIDDEN), jnp.float32)
    w1 = s * jax.random.normal(ks[3], (HIDDEN, MLP), jnp.float32)
    b1 = s * jax.random.normal(ks[4], (1, MLP), jnp.float32)
    w2 = s * jax.random.normal(ks[5], (MLP, HIDDEN), jnp.float32)
    b2 = s * jax.random.normal(ks[6], (1, HIDDEN), jnp.float32)
    return (ln1_g, ln1_b, w_qkv, w_out, b_out, ln2_g, ln2_b, w1, b1, w2, b2)


if __name__ == "__main__":
    key = jax.random.PRNGKey(0)
    kx, kp = jax.random.split(key)
    x = jax.random.normal(kx, (BATCH, SEQ, HIDDEN), jnp.float32)
    params = init_params(kp)

    out = self_attention_block(x, params)
    out = jax.block_until_ready(out)

    ref = reference(x, params)
    assert out.shape == (BATCH, SEQ, HIDDEN)
    assert jnp.allclose(out, ref, atol=1e-4, rtol=1e-4), "mismatch vs reference"
    print("KERNEL_OK")
</pallas_src>

<mosaic_0001>
module attributes {stable_mosaic.version = 11 : i64} {
  func.func @self_attn_block_kernel(%arg0: i32, %arg1: memref<16x32xf32, #tpu.memory_space<vmem>>, %arg2: memref<32x96xf32, #tpu.memory_space<vmem>>, %arg3: memref<152x128xf32, #tpu.memory_space<vmem>>, %arg4: memref<16x32xf32, #tpu.memory_space<vmem>>) attributes {dimension_semantics = [#tpu.dimension_semantics<arbitrary>], iteration_bounds = array<i64: 1>, scalar_prefetch = 0 : i64, scratch_operands = 0 : i64, tpu.core_type = #tpu.core_type<tc>, window_params = [{pipeline_mode = #tpu.pipeline_mode<synchronous>, transform_indices = @transform_0, window_bounds = array<i64: 16, 32>}, {pipeline_mode = #tpu.pipeline_mode<synchronous>, transform_indices = @transform_1, window_bounds = array<i64: 32, 96>}, {pipeline_mode = #tpu.pipeline_mode<synchronous>, transform_indices = @transform_2, window_bounds = array<i64: 152, 128>}, {pipeline_mode = #tpu.pipeline_mode<synchronous>, transform_indices = @transform_3, window_bounds = array<i64: 16, 32>}]} {
    %c0 = arith.constant 0 : index
    %c0_0 = arith.constant 0 : index
    %0 = vector.load %arg1[%c0, %c0_0] : memref<16x32xf32, #tpu.memory_space<vmem>>, vector<16x32xf32>
    %c0_1 = arith.constant 0 : index
    %c0_2 = arith.constant 0 : index
    %1 = vector.load %arg3[%c0_1, %c0_2] : memref<152x128xf32, #tpu.memory_space<vmem>>, vector<32x32xf32>
    %c32 = arith.constant 32 : index
    %c0_3 = arith.constant 0 : index
    %2 = vector.load %arg3[%c32, %c0_3] : memref<152x128xf32, #tpu.memory_space<vmem>>, vector<32x64xf32>
    %c64 = arith.constant 64 : index
    %c0_4 = arith.constant 0 : index
    %3 = vector.load %arg3[%c64, %c0_4] : memref<152x128xf32, #tpu.memory_space<vmem>>, vector<64x32xf32>
    %c128 = arith.constant 128 : index
    %c0_5 = arith.constant 0 : index
    %4 = vector.load %arg3[%c128, %c0_5] : memref<152x128xf32, #tpu.memory_space<vmem>>, vector<16x16xf32>
    %c144 = arith.constant 144 : index
    %c0_6 = arith.constant 0 : index
    %5 = vector.load %arg3[%c144, %c0_6] : memref<152x128xf32, #tpu.memory_space<vmem>>, vector<1x32xf32>
    %c145 = arith.constant 145 : index
    %c0_7 = arith.constant 0 : index
    %6 = vector.load %arg3[%c145, %c0_7] : memref<152x128xf32, #tpu.memory_space<vmem>>, vector<1x32xf32>
    %c146 = arith.constant 146 : index
    %c0_8 = arith.constant 0 : index
    %7 = vector.load %arg3[%c146, %c0_8] : memref<152x128xf32, #tpu.memory_space<vmem>>, vector<1x32xf32>
    %c147 = arith.constant 147 : index
    %c0_9 = arith.constant 0 : index
    %8 = vector.load %arg3[%c147, %c0_9] : memref<152x128xf32, #tpu.memory_space<vmem>>, vector<1x32xf32>
    %c148 = arith.constant 148 : index
    %c0_10 = arith.constant 0 : index
    %9 = vector.load %arg3[%c148, %c0_10] : memref<152x128xf32, #tpu.memory_space<vmem>>, vector<1x32xf32>
    %c149 = arith.constant 149 : index
    %c0_11 = arith.constant 0 : index
    %10 = vector.load %arg3[%c149, %c0_11] : memref<152x128xf32, #tpu.memory_space<vmem>>, vector<1x32xf32>
    %c150 = arith.constant 150 : index
    %c0_12 = arith.constant 0 : index
    %11 = vector.load %arg3[%c150, %c0_12] : memref<152x128xf32, #tpu.memory_space<vmem>>, vector<1x64xf32>
    %cst = arith.constant dense<0.000000e+00> : vector<16xf32>
    %12 = vector.multi_reduction <add>, %0, %cst [1] : vector<16x32xf32> to vector<16xf32>
    %13 = vector.shape_cast %12 : vector<16xf32> to vector<16x1xf32>
    %cst_13 = arith.constant 3.200000e+01 : f32
    %14 = vector.broadcast %cst_13 : f32 to vector<16x1xf32>
    %15 = arith.divf %13, %14 : vector<16x1xf32>
    %16 = vector.broadcast %15 : vector<16x1xf32> to vector<16x32xf32>
    %17 = arith.subf %0, %16 : vector<16x32xf32>
    %18 = arith.mulf %17, %17 : vector<16x32xf32>
    %cst_14 = arith.constant dense<0.000000e+00> : vector<16xf32>
    %19 = vector.multi_reduction <add>, %18, %cst_14 [1] : vector<16x32xf32> to vector<16xf32>
    %20 = vector.shape_cast %19 : vector<16xf32> to vector<16x1xf32>
    %cst_15 = arith.constant 3.200000e+01 : f32
    %21 = vector.broadcast %cst_15 : f32 to vector<16x1xf32>
    %22 = arith.divf %20, %21 : vector<16x1xf32>
    %23 = vector.broadcast %15 : vector<16x1xf32> to vector<16x32xf32>
    %24 = arith.subf %0, %23 : vector<16x32xf32>
    %cst_16 = arith.constant 9.99999974E-6 : f32
    %25 = vector.broadcast %cst_16 : f32 to vector<16x1xf32>
    %26 = arith.addf %22, %25 : vector<16x1xf32>
    %27 = math.rsqrt %26 : vector<16x1xf32>
    %28 = vector.broadcast %27 : vector<16x1xf32> to vector<16x32xf32>
    %29 = arith.mulf %24, %28 : vector<16x32xf32>
    %30 = vector.broadcast %5 : vector<1x32xf32> to vector<16x32xf32>
    %31 = arith.mulf %29, %30 : vector<16x32xf32>
    %32 = vector.broadcast %6 : vector<1x32xf32> to vector<16x32xf32>
    %33 = arith.addf %31, %32 : vector<16x32xf32>
    %c0_17 = arith.constant 0 : index
    %c0_18 = arith.constant 0 : index
    %34 = vector.load %arg2[%c0_17, %c0_18] : memref<32x96xf32, #tpu.memory_space<vmem>>, vector<32x96xf32>
    %cst_19 = arith.constant dense<0.000000e+00> : vector<16x96xf32>
    %35 = tpu.matmul %33, %34, %cst_19 {dimension_numbers = #tpu.dot_dimension_numbers<[1], [0], [0], [1], [0, 0, 1, 1], [], []>} : vector<16x32xf32>, vector<32x96xf32>, vector<16x96xf32> -> vector<16x96xf32>
    %36 = vector.extract_strided_slice %35 {offsets = [0, 0], sizes = [16, 8], strides = [1, 1]} : vector<16x96xf32> to vector<16x8xf32>
    %37 = vector.extract_strided_slice %35 {offsets = [0, 32], sizes = [16, 8], strides = [1, 1]} : vector<16x96xf32> to vector<16x8xf32>
    %38 = vector.extract_strided_slice %35 {offsets = [0, 64], sizes = [16, 8], strides = [1, 1]} : vector<16x96xf32> to vector<16x8xf32>
    "tpu.trace_start"() <{level = 10 : i32, message = "ne,me->nm"}> : () -> ()
    %cst_20 = arith.constant dense<0.000000e+00> : vector<16x16xf32>
    %39 = tpu.matmul %36, %37, %cst_20 {dimension_numbers = #tpu.dot_dimension_numbers<[1], [1], [0], [0], [0, 0, 1, 0], [], []>} : vector<16x8xf32>, vector<16x8xf32>, vector<16x16xf32> -> vector<16x16xf32>
    "tpu.trace_stop"() : () -> ()
    %40 = arith.addf %39, %4 : vector<16x16xf32>
    %cst_21 = arith.constant dense<0xFF800000> : vector<16xf32>
    %41 = vector.multi_reduction <maximumf>, %40, %cst_21 [1] : vector<16x16xf32> to vector<16xf32>
    %42 = vector.shape_cast %41 : vector<16xf32> to vector<16x1xf32>
    %43 = vector.broadcast %42 : vector<16x1xf32> to vector<16x16xf32>
    %44 = arith.subf %40, %43 : vector<16x16xf32>
    %45 = math.exp %44 : vector<16x16xf32>
    %cst_22 = arith.constant dense<0.000000e+00> : vector<16xf32>
    %46 = vector.multi_reduction <add>, %45, %cst_22 [1] : vector<16x16xf32> to vector<16xf32>
    %47 = vector.shape_cast %46 : vector<16xf32> to vector<16x1xf32>
    %48 = tpu.reciprocal %47 {approx = true} : vector<16x1xf32> -> vector<16x1xf32>
    %49 = vector.broadcast %48 : vector<16x1xf32> to vector<16x16xf32>
    %50 = arith.mulf %45, %49 : vector<16x16xf32>
    %cst_23 = arith.constant dense<0.000000e+00> : vector<16x8xf32>
    %51 = tpu.matmul %50, %38, %cst_23 {dimension_numbers = #tpu.dot_dimension_numbers<[1], [0], [0], [1], [0, 0, 1, 1], [], []>} : vector<16x16xf32>, vector<16x8xf32>, vector<16x8xf32> -> vector<16x8xf32>
    %52 = vector.extract_strided_slice %35 {offsets = [0, 8], sizes = [16, 8], strides = [1, 1]} : vector<16x96xf32> to vector<16x8xf32>
    %53 = vector.extract_strided_slice %35 {offsets = [0, 40], sizes = [16, 8], strides = [1, 1]} : vector<16x96xf32> to vector<16x8xf32>
    %54 = vector.extract_strided_slice %35 {offsets = [0, 72], sizes = [16, 8], strides = [1, 1]} : vector<16x96xf32> to vector<16x8xf32>
    "tpu.trace_start"() <{level = 10 : i32, message = "ne,me->nm"}> : () -> ()
    %cst_24 = arith.constant dense<0.000000e+00> : vector<16x16xf32>
    %55 = tpu.matmul %52, %53, %cst_24 {dimension_numbers = #tpu.dot_dimension_numbers<[1], [1], [0], [0], [0, 0, 1, 0], [], []>} : vector<16x8xf32>, vector<16x8xf32>, vector<16x16xf32> -> vector<16x16xf32>
    "tpu.trace_stop"() : () -> ()
    %56 = arith.addf %55, %4 : vector<16x16xf32>
    %cst_25 = arith.constant dense<0xFF800000> : vector<16xf32>
    %57 = vector.multi_reduction <maximumf>, %56, %cst_25 [1] : vector<16x16xf32> to vector<16xf32>
    %58 = vector.shape_cast %57 : vector<16xf32> to vector<16x1xf32>
    %59 = vector.broadcast %58 : vector<16x1xf32> to vector<16x16xf32>
    %60 = arith.subf %56, %59 : vector<16x16xf32>
    %61 = math.exp %60 : vector<16x16xf32>
    %cst_26 = arith.constant dense<0.000000e+00> : vector<16xf32>
    %62 = vector.multi_reduction <add>, %61, %cst_26 [1] : vector<16x16xf32> to vector<16xf32>
    %63 = vector.shape_cast %62 : vector<16xf32> to vector<16x1xf32>
    %64 = tpu.reciprocal %63 {approx = true} : vector<16x1xf32> -> vector<16x1xf32>
    %65 = vector.broadcast %64 : vector<16x1xf32> to vector<16x16xf32>
    %66 = arith.mulf %61, %65 : vector<16x16xf32>
    %cst_27 = arith.constant dense<0.000000e+00> : vector<16x8xf32>
    %67 = tpu.matmul %66, %54, %cst_27 {dimension_numbers = #tpu.dot_dimension_numbers<[1], [0], [0], [1], [0, 0, 1, 1], [], []>} : vector<16x16xf32>, vector<16x8xf32>, vector<16x8xf32> -> vector<16x8xf32>
    %68 = vector.extract_strided_slice %35 {offsets = [0, 16], sizes = [16, 8], strides = [1, 1]} : vector<16x96xf32> to vector<16x8xf32>
    %69 = vector.extract_strided_slice %35 {offsets = [0, 48], sizes = [16, 8], strides = [1, 1]} : vector<16x96xf32> to vector<16x8xf32>
    %70 = vector.extract_strided_slice %35 {offsets = [0, 80], sizes = [16, 8], strides = [1, 1]} : vector<16x96xf32> to vector<16x8xf32>
    "tpu.trace_start"() <{level = 10 : i32, message = "ne,me->nm"}> : () -> ()
    %cst_28 = arith.constant dense<0.000000e+00> : vector<16x16xf32>
    %71 = tpu.matmul %68, %69, %cst_28 {dimension_numbers = #tpu.dot_dimension_numbers<[1], [1], [0], [0], [0, 0, 1, 0], [], []>} : vector<16x8xf32>, vector<16x8xf32>, vector<16x16xf32> -> vector<16x16xf32>
    "tpu.trace_stop"() : () -> ()
    %72 = arith.addf %71, %4 : vector<16x16xf32>
    %cst_29 = arith.constant dense<0xFF800000> : vector<16xf32>
    %73 = vector.multi_reduction <maximumf>, %72, %cst_29 [1] : vector<16x16xf32> to vector<16xf32>
    %74 = vector.shape_cast %73 : vector<16xf32> to vector<16x1xf32>
    %75 = vector.broadcast %74 : vector<16x1xf32> to vector<16x16xf32>
    %76 = arith.subf %72, %75 : vector<16x16xf32>
    %77 = math.exp %76 : vector<16x16xf32>
    %cst_30 = arith.constant dense<0.000000e+00> : vector<16xf32>
    %78 = vector.multi_reduction <add>, %77, %cst_30 [1] : vector<16x16xf32> to vector<16xf32>
    %79 = vector.shape_cast %78 : vector<16xf32> to vector<16x1xf32>
    %80 = tpu.reciprocal %79 {approx = true} : vector<16x1xf32> -> vector<16x1xf32>
    %81 = vector.broadcast %80 : vector<16x1xf32> to vector<16x16xf32>
    %82 = arith.mulf %77, %81 : vector<16x16xf32>
    %cst_31 = arith.constant dense<0.000000e+00> : vector<16x8xf32>
    %83 = tpu.matmul %82, %70, %cst_31 {dimension_numbers = #tpu.dot_dimension_numbers<[1], [0], [0], [1], [0, 0, 1, 1], [], []>} : vector<16x16xf32>, vector<16x8xf32>, vector<16x8xf32> -> vector<16x8xf32>
    %84 = vector.extract_strided_slice %35 {offsets = [0, 24], sizes = [16, 8], strides = [1, 1]} : vector<16x96xf32> to vector<16x8xf32>
    %85 = vector.extract_strided_slice %35 {offsets = [0, 56], sizes = [16, 8], strides = [1, 1]} : vector<16x96xf32> to vector<16x8xf32>
    %86 = vector.extract_strided_slice %35 {offsets = [0, 88], sizes = [16, 8], strides = [1, 1]} : vector<16x96xf32> to vector<16x8xf32>
    "tpu.trace_start"() <{level = 10 : i32, message = "ne,me->nm"}> : () -> ()
    %cst_32 = arith.constant dense<0.000000e+00> : vector<16x16xf32>
    %87 = tpu.matmul %84, %85, %cst_32 {dimension_numbers = #tpu.dot_dimension_numbers<[1], [1], [0], [0], [0, 0, 1, 0], [], []>} : vector<16x8xf32>, vector<16x8xf32>, vector<16x16xf32> -> vector<16x16xf32>
    "tpu.trace_stop"() : () -> ()
    %88 = arith.addf %87, %4 : vector<16x16xf32>
    %cst_33 = arith.constant dense<0xFF800000> : vector<16xf32>
    %89 = vector.multi_reduction <maximumf>, %88, %cst_33 [1] : vector<16x16xf32> to vector<16xf32>
    %90 = vector.shape_cast %89 : vector<16xf32> to vector<16x1xf32>
    %91 = vector.broadcast %90 : vector<16x1xf32> to vector<16x16xf32>
    %92 = arith.subf %88, %91 : vector<16x16xf32>
    %93 = math.exp %92 : vector<16x16xf32>
    %cst_34 = arith.constant dense<0.000000e+00> : vector<16xf32>
    %94 = vector.multi_reduction <add>, %93, %cst_34 [1] : vector<16x16xf32> to vector<16xf32>
    %95 = vector.shape_cast %94 : vector<16xf32> to vector<16x1xf32>
    %96 = tpu.reciprocal %95 {approx = true} : vector<16x1xf32> -> vector<16x1xf32>
    %97 = vector.broadcast %96 : vector<16x1xf32> to vector<16x16xf32>
    %98 = arith.mulf %93, %97 : vector<16x16xf32>
    %cst_35 = arith.constant dense<0.000000e+00> : vector<16x8xf32>
    %99 = tpu.matmul %98, %86, %cst_35 {dimension_numbers = #tpu.dot_dimension_numbers<[1], [0], [0], [1], [0, 0, 1, 1], [], []>} : vector<16x16xf32>, vector<16x8xf32>, vector<16x8xf32> -> vector<16x8xf32>
    %100 = tpu.concatenate %51, %67, %83, %99 in 1 : vector<16x8xf32>, vector<16x8xf32>, vector<16x8xf32>, vector<16x8xf32> -> vector<16x32xf32>
    %cst_36 = arith.constant dense<0.000000e+00> : vector<16x32xf32>
    %101 = tpu.matmul %100, %1, %cst_36 {dimension_numbers = #tpu.dot_dimension_numbers<[1], [0], [0], [1], [0, 0, 1, 1], [], []>} : vector<16x32xf32>, vector<32x32xf32>, vector<16x32xf32> -> vector<16x32xf32>
    %102 = vector.broadcast %7 : vector<1x32xf32> to vector<16x32xf32>
    %103 = arith.addf %101, %102 : vector<16x32xf32>
    %104 = arith.addf %0, %103 : vector<16x32xf32>
    %cst_37 = arith.constant dense<0.000000e+00> : vector<16xf32>
    %105 = vector.multi_reduction <add>, %104, %cst_37 [1] : vector<16x32xf32> to vector<16xf32>
    %106 = vector.shape_cast %105 : vector<16xf32> to vector<16x1xf32>
    %cst_38 = arith.constant 3.200000e+01 : f32
    %107 = vector.broadcast %cst_38 : f32 to vector<16x1xf32>
    %108 = arith.divf %106, %107 : vector<16x1xf32>
    %109 = vector.broadcast %108 : vector<16x1xf32> to vector<16x32xf32>
    %110 = arith.subf %104, %109 : vector<16x32xf32>
    %111 = arith.mulf %110, %110 : vector<16x32xf32>
    %cst_39 = arith.constant dense<0.000000e+00> : vector<16xf32>
    %112 = vector.multi_reduction <add>, %111, %cst_39 [1] : vector<16x32xf32> to vector<16xf32>
    %113 = vector.shape_cast %112 : vector<16xf32> to vector<16x1xf32>
    %cst_40 = arith.constant 3.200000e+01 : f32
    %114 = vector.broadcast %cst_40 : f32 to vector<16x1xf32>
    %115 = arith.divf %113, %114 : vector<16x1xf32>
    %116 = vector.broadcast %108 : vector<16x1xf32> to vector<16x32xf32>
    %117 = arith.subf %104, %116 : vector<16x32xf32>
    %cst_41 = arith.constant 9.99999974E-6 : f32
    %118 = vector.broadcast %cst_41 : f32 to vector<16x1xf32>
    %119 = arith.addf %115, %118 : vector<16x1xf32>
    %120 = math.rsqrt %119 : vector<16x1xf32>
    %121 = vector.broadcast %120 : vector<16x1xf32> to vector<16x32xf32>
    %122 = arith.mulf %117, %121 : vector<16x32xf32>
    %123 = vector.broadcast %8 : vector<1x32xf32> to vector<16x32xf32>
    %124 = arith.mulf %122, %123 : vector<16x32xf32>
    %125 = vector.broadcast %9 : vector<1x32xf32> to vector<16x32xf32>
    %126 = arith.addf %124, %125 : vector<16x32xf32>
    %cst_42 = arith.constant dense<0.000000e+00> : vector<16x64xf32>
    %127 = tpu.matmul %126, %2, %cst_42 {dimension_numbers = #tpu.dot_dimension_numbers<[1], [0], [0], [1], [0, 0, 1, 1], [], []>} : vector<16x32xf32>, vector<32x64xf32>, vector<16x64xf32> -> vector<16x64xf32>
    %128 = vector.broadcast %11 : vector<1x64xf32> to vector<16x64xf32>
    %129 = arith.addf %127, %128 : vector<16x64xf32>
    %cst_43 = arith.constant 5.000000e-01 : f32
    %130 = vector.broadcast %cst_43 : f32 to vector<16x64xf32>
    %131 = arith.mulf %130, %129 : vector<16x64xf32>
    %cst_44 = arith.constant 2.000000e+00 : f32
    %132 = math.sqrt %cst_44 : f32
    %133 = vector.broadcast %132 : f32 to vector<16x64xf32>
    %134 = arith.divf %129, %133 : vector<16x64xf32>
    %135 = math.erf %134 : vector<16x64xf32>
    %cst_45 = arith.constant 1.000000e+00 : f32
    %136 = vector.broadcast %cst_45 : f32 to vector<16x64xf32>
    %137 = arith.addf %136, %135 : vector<16x64xf32>
    %138 = arith.mulf %131, %137 : vector<16x64xf32>
    %cst_46 = arith.constant dense<0.000000e+00> : vector<16x32xf32>
    %139 = tpu.matmul %138, %3, %cst_46 {dimension_numbers = #tpu.dot_dimension_numbers<[1], [0], [0], [1], [0, 0, 1, 1], [], []>} : vector<16x64xf32>, vector<64x32xf32>, vector<16x32xf32> -> vector<16x32xf32>
    %140 = vector.broadcast %10 : vector<1x32xf32> to vector<16x32xf32>
    %141 = arith.addf %139, %140 : vector<16x32xf32>
    %142 = arith.addf %104, %141 : vector<16x32xf32>
    %c0_47 = arith.constant 0 : index
    %c0_48 = arith.constant 0 : index
    %143 = vector.load %arg4[%c0_47, %c0_48] : memref<16x32xf32, #tpu.memory_space<vmem>>, vector<16x32xf32>
    tpu.vector_store %arg4[%c0_47, %c0_48], %142 {strides = array<i32>} : memref<16x32xf32, #tpu.memory_space<vmem>>, vector<16x32xf32>,
    return
  }
  func.func @transform_0(%arg0: i32) -> (i32, i32) {
    %c0_i32 = arith.constant 0 : i32
    %c0_i32_0 = arith.constant 0 : i32
    %c0_i32_1 = arith.constant 0 : i32
    return %c0_i32, %c0_i32_0 : i32, i32
  }
  func.func @transform_1(%arg0: i32) -> (i32, i32) {
    %c0_i32 = arith.constant 0 : i32
    %c0_i32_0 = arith.constant 0 : i32
    %c0_i32_1 = arith.constant 0 : i32
    return %c0_i32, %c0_i32_0 : i32, i32
  }
  func.func @transform_2(%arg0: i32) -> (i32, i32) {
    %c0_i32 = arith.constant 0 : i32
    %c0_i32_0 = arith.constant 0 : i32
    %c0_i32_1 = arith.constant 0 : i32
    return %c0_i32, %c0_i32_0 : i32, i32
  }
  func.func @transform_3(%arg0: i32) -> (i32, i32) {
    %c0_i32 = arith.constant 0 : i32
    %c0_i32_0 = arith.constant 0 : i32
    %c0_i32_1 = arith.constant 0 : i32
    return %c0_i32, %c0_i32_0 : i32, i32
  }
}

</mosaic_0001>

<llo_original>
// kernel: tpu_custom_call.1
$region0: #{tpu_custom_call.1}
  #allocation0 [shape = 'u32[]', space=smem, size = 0x4, offset = 0x4, fixed_abs, tag = 'smem constant byte address 0x4 - core index']
  #allocation1 [shape = 'u32[144,128]{1,0:T(1,128)}', space=vmem, size = 0x12000, scoped, tag = 'internal scratch']
  %s0 = inlined_call_operand.hbm [shape: f32[16,32], index: 0, kind: input, shape index: {}]
  %s1 = inlined_call_operand.hbm [shape: f32[32,96], index: 1, kind: input, shape index: {}]
  %s2 = inlined_call_operand.hbm [shape: f32[152,128], index: 2, kind: input, shape index: {}]
  %s3 = inlined_call_operand.hbm [shape: f32[16,32], index: 3, kind: output, shape index: {}]
  %s4 = sld [smem:[#allocation0]]
  $region34: #{tpu_custom_call.1} parent=0
    _
  %s6 = ssub.s32 1, %s4
  %s7 = scalar_select 0, %s6, %s4
  $region1: #{tpu_custom_call.1} parent=0
    #allocation2 [shape = 'u8[8192]{0}', space=vmem, size = 0x2000, scoped, tag = 'input window, operand 0, single buffered']
    #allocation3 [shape = 's32[1]{0}', space=sflag, size = 0x4, scoped, tag = 'scoped memory for tpu_custom_call.1']
    #allocation4 [shape = 's32[1]{0}', space=sflag, size = 0x4, scoped, tag = 'scoped memory for tpu_custom_call.1']
    #allocation5 [shape = 'u8[16384]{0}', space=vmem, size = 0x4000, scoped, tag = 'input window, operand 1, single buffered']
    #allocation6 [shape = 's32[1]{0}', space=sflag, size = 0x4, scoped, tag = 'scoped memory for tpu_custom_call.1']
    #allocation7 [shape = 'u8[77824]{0}', space=vmem, size = 0x13000, scoped, tag = 'input window, operand 2, single buffered']
    #allocation8 [shape = 'u8[8192]{0}', space=vmem, size = 0x2000, scoped, tag = 'output window, operand 0, single buffered']
    %8 = vsyncpa [#allocation3], 0
    %9 = vsyncpa [#allocation6], 0
    %10 = vsyncpa [#allocation4], 0
    // Predicated region
    $region2: #{tpu_custom_call.1} parent=1 // pred_check
      _
    $region3: #{tpu_custom_call.1} parent=1 // pred_check_branch
      %12 = sbr.rel (0) target = $region5
    $region4: #{tpu_custom_call.1} parent=1 // pred_region
      %s14 = ssub.s32 256, 256
      %15 = vsyncadd [#allocation3], %s14
      %s16 = sshll.u32 [#allocation2], 4
      %s17 = int_to_ptr.vmem [resolvable:$true] %s16
      %22 = dma.hbm_to_vmem [thread:$0]  %s0, 256, %s17, [#allocation3], 128, 128, 8
    $region5: #{tpu_custom_call.1} parent=1 // pred_fallthru
      _
    // Predicated region
    $region6: #{tpu_custom_call.1} parent=1 // pred_check
      _
    $region7: #{tpu_custom_call.1} parent=1 // pred_check_branch
      %24 = sbr.rel (0) target = $region9
    $region8: #{tpu_custom_call.1} parent=1 // pred_region
      %s26 = ssub.s32 512, 512
      %27 = vsyncadd [#allocation6], %s26
      %s28 = sshll.u32 [#allocation5], 4
      %s29 = int_to_ptr.vmem [resolvable:$true] %s28
      %34 = dma.hbm_to_vmem [thread:$0]  %s1, 512, %s29, [#allocation6], 128, 128, 8
    $region9: #{tpu_custom_call.1} parent=1 // pred_fallthru
      _
    // Predicated region
    $region10: #{tpu_custom_call.1} parent=1 // pred_check
      _
    $region11: #{tpu_custom_call.1} parent=1 // pred_check_branch
      %36 = sbr.rel (0) target = $region13
    $region12: #{tpu_custom_call.1} parent=1 // pred_region
      %s38 = ssub.s32 2432, 2432
      %39 = vsyncadd [#allocation6], %s38
      %s40 = sshll.u32 [#allocation7], 4
      %s41 = int_to_ptr.vmem [resolvable:$true] %s40
      %46 = dma.hbm_to_vmem [thread:$0]  %s2, 2432, %s41, [#allocation6], 128, 128, 8
    $region13: #{tpu_custom_call.1} parent=1 // pred_fallthru
      _
    // Predicated region
    $region14: #{tpu_custom_call.1} parent=1 // pred_check
      _
    $region15: #{tpu_custom_call.1} parent=1 // pred_check_branch
      %48 = sbr.rel (0) target = $region17
    $region16: #{tpu_custom_call.1} parent=1 // pred_region
      %49 = dma.done [#allocation3], 256
    $region17: #{tpu_custom_call.1} parent=1 // pred_fallthru
      _
    // Predicated region
    $region18: #{tpu_custom_call.1} parent=1 // pred_check
      _
    $region19: #{tpu_custom_call.1} parent=1 // pred_check_branch
      %51 = sbr.rel (0) target = $region21
    $region20: #{tpu_custom_call.1} parent=1 // pred_region
      %52 = dma.done [#allocation6], 512
    $region21: #{tpu_custom_call.1} parent=1 // pred_fallthru
      _
    // Predicated region
    $region22: #{tpu_custom_call.1} parent=1 // pred_check
      _
    $region23: #{tpu_custom_call.1} parent=1 // pred_check_branch
      %54 = sbr.rel (0) target = $region25
    $region24: #{tpu_custom_call.1} parent=1 // pred_region
      %55 = dma.done [#allocation6], 2432
    $region25: #{tpu_custom_call.1} parent=1 // pred_fallthru
      _
    %v56 = vld [vmem:[#allocation2] sm:$0xff]
    %v57 = vld [vmem:[#allocation2 + $0x8] sm:$0xff]
    %v58 = vld [vmem:[#allocation7] sm:$0xff]
    %v59 = vld [vmem:[#allocation7 + $0x8] sm:$0xff]
    %v60 = vld [vmem:[#allocation7 + $0x10] sm:$0xff]
    %v61 = vld [vmem:[#allocation7 + $0x18] sm:$0xff]
    %v62 = vld [vmem:[#allocation7 + $0x20] sm:$0xff]
    %v63 = vld [vmem:[#allocation7 + $0x28] sm:$0xff]
    %v64 = vld [vmem:[#allocation7 + $0x30] sm:$0xff]
    %v65 = vld [vmem:[#allocation7 + $0x38] sm:$0xff]
    %v66 = vld [vmem:[#allocation7 + $0x40] sm:$0xff]
    %v67 = vld [vmem:[#allocation7 + $0x48] sm:$0xff]
    %v68 = vld [vmem:[#allocation7 + $0x50] sm:$0xff]
    %v69 = vld [vmem:[#allocation7 + $0x58] sm:$0xff]
    %v70 = vld [vmem:[#allocation7 + $0x60] sm:$0xff]
    %v71 = vld [vmem:[#allocation7 + $0x68] sm:$0xff]
    %v72 = vld [vmem:[#allocation7 + $0x70] sm:$0xff]
    %v73 = vld [vmem:[#allocation7 + $0x78] sm:$0xff]
    %v74 = vld [vmem:[#allocation7 + $0x80] sm:$0xff]
    %v75 = vld [vmem:[#allocation7 + $0x88] sm:$0xff]
    %v76 = vld [vmem:[#allocation7 + $0x90] sm:$0x1]
    %v77 = vld [vmem:[#allocation7 + $0x91] sm:$0x1]
    %v78 = vld [vmem:[#allocation7 + $0x92] sm:$0x1]
    %v79 = vld [vmem:[#allocation7 + $0x93] sm:$0x1]
    %v80 = vld [vmem:[#allocation7 + $0x94] sm:$0x1]
    %v81 = vld [vmem:[#allocation7 + $0x95] sm:$0x1]
    %v82 = vld [vmem:[#allocation7 + $0x96] sm:$0x1]
    %vm83 = vcmask 261120
    %v84 = vsel %vm83, %v56, 0.0
    %85 = vadd.xlane.f32.xlu0 %v84
    %v86 = vpop.xlane.xlu0 %85
    %v87 = vsel %vm83, %v57, 0.0
    %88 = vadd.xlane.f32.xlu0 %v87
    %v89 = vpop.xlane.xlu0 %88
    %v90 = vrcp.pop 32.0
    %v91 = vmul.f32 %v86, %v90
    %v92 = vmul.f32 %v89, %v90
    %v93 = vsub.f32 %v56, %v91
    %v94 = vsub.f32 %v57, %v92
    %v95 = vmul.f32 %v93, %v93
    %v96 = vmul.f32 %v94, %v94
    %v97 = vsel %vm83, %v95, 0.0
    %98 = vadd.xlane.f32.xlu0 %v97
    %v99 = vpop.xlane.xlu0 %98
    %v100 = vsel %vm83, %v96, 0.0
    %101 = vadd.xlane.f32.xlu0 %v100
    %v102 = vpop.xlane.xlu0 %101
    %v103 = vmul.f32 %v99, %v90
    %v104 = vmul.f32 %v102, %v90
    %v105 = vadd.f32 %v103, 1e-05
    %v106 = vadd.f32 %v104, 1e-05
    %v107 = vrsqrt.pop %v105
    %v108 = vrsqrt.pop %v106
    %v109 = vmul.f32 %v93, %v107
    %v110 = vmul.f32 %v94, %v108
    %v111 = vlaneseq
    %v112 = vshrl.u32 %v111, 7
    %v113 = vsub.s32 0, %v112
    %v114 = vrot.slane %v76, %v113
    %v115 = vmul.f32 %v109, %v114
    %v116 = vmul.f32 %v110, %v114
    %v117 = vlaneseq
    %v118 = vshrl.u32 %v117, 7
    %v119 = vsub.s32 0, %v118
    %v120 = vrot.slane %v77, %v119
    %v121 = vadd.f32 %v115, %v120
    %v122 = vadd.f32 %v116, %v120
    %v123 = vld [vmem:[#allocation5] sm:$0xff]
    %v124 = vld [vmem:[#allocation5 + $0x8] sm:$0xff]
    %v125 = vld [vmem:[#allocation5 + $0x10] sm:$0xff]
    %v126 = vld [vmem:[#allocation5 + $0x18] sm:$0xff]
    %v128 = vsel %vm83, %v121, 0
    %v131 = vsel %vm83, %v122, 0
    %133 = vmatprep.subr.mxu0 0.0
    %134 = vmatpush1.msra.mxu0 %v123
    %135 = vmatprep.subr.mxu0 0.0
    %136 = vmatpush1.msra.mxu0 %v124
    %137 = vmatprep.subr.mxu0 0.0
    %138 = vmatpush1.msra.mxu0 %v125
    %139 = vmatprep.subr.mxu0 0.0
    %140 = vmatpush1.msra.mxu0 %v126
    %141 = vmatprep.subr.mxu0 0.0
    %142 = vmatpush1.msra.mxu0 0.0
    %143 = vmatprep.subr.mxu0 0.0
    %144 = vmatpush1.msra.mxu0 0.0
    %145 = vmatprep.subr.mxu0 0.0
    %146 = vmatpush1.msra.mxu0 0.0
    %147 = vmatprep.subr.mxu0 0.0
    %148 = vmatpush1.msra.mxu0 0.0
    %149 = vmatprep.subr.mxu0 0.0
    %150 = vmatpush1.msra.mxu0 0.0
    %151 = vmatprep.subr.mxu0 0.0
    %152 = vmatpush1.msra.mxu0 0.0
    %153 = vmatprep.subr.mxu0 0.0
    %154 = vmatpush1.msra.mxu0 0.0
    %155 = vmatprep.subr.mxu0 0.0
    %156 = vmatpush1.msra.mxu0 0.0
    %157 = vmatprep.subr.mxu0 0.0
    %158 = vmatpush1.msra.mxu0 0.0
    %159 = vmatprep.subr.mxu0 0.0
    %160 = vmatpush1.msra.mxu0 0.0
    %161 = vmatprep.subr.mxu0 0.0
    %162 = vmatpush1.msra.mxu0 0.0
    %163 = vmatprep.subr.mxu0 0.0
    %164 = vmatpush1.msra.mxu0 0.0
    %165 = vmatprep.subr.mxu0 0.0
    %166 = vmatpush1.msra.mxu0 0.0
    %167 = vmatprep.subr.mxu0 0.0
    %168 = vmatpush1.msra.mxu0 0.0
    %169 = vmatprep.subr.mxu0 0.0
    %170 = vmatpush1.msra.mxu0 0.0
    %171 = vmatprep.subr.mxu0 0.0
    %172 = vmatpush1.msra.mxu0 0.0
    %173 = vmatprep.subr.mxu0 0.0
    %174 = vmatpush1.msra.mxu0 0.0
    %175 = vmatprep.subr.mxu0 0.0
    %176 = vmatpush1.msra.mxu0 0.0
    %177 = vmatprep.subr.mxu0 0.0
    %178 = vmatpush1.msra.mxu0 0.0
    %179 = vmatprep.subr.mxu0 0.0
    %180 = vmatpush1.msra.mxu0 0.0
    %181 = vmatprep.subr.mxu0 0.0
    %182 = vmatpush1.msra.mxu0 0.0
    %183 = vmatprep.subr.mxu0 0.0
    %184 = vmatpush1.msra.mxu0 0.0
    %185 = vmatprep.subr.mxu0 0.0
    %186 = vmatpush1.msra.mxu0 0.0
    %187 = vmatprep.subr.mxu0 0.0
    %188 = vmatpush1.msra.mxu0 0.0
    %189 = vmatprep.subr.mxu0 0.0
    %190 = vmatpush1.msra.mxu0 0.0
    %191 = vmatprep.subr.mxu0 0.0
    %192 = vmatpush1.msra.mxu0 0.0
    %193 = vmatprep.subr.mxu0 0.0
    %194 = vmatpush1.msra.mxu0 0.0
    %195 = vmatprep.subr.mxu0 0.0
    %196 = vmatpush1.msra.mxu0 0.0
    %197 = vmatprep.mubr.f32.mxu0 0.0
    %198 = vmatmul.mubr.f32.gmra.mrb[0].mxu0 %v128
    %v199 = vpop.f32.mrb[0].mxu0
    %v200 = vadd.f32 0.0, %v199
    %v201 = vpop.f32.mrb[0].mxu0
    %202 = vmatprep.mubr.f32.mxu0 0.0
    %203 = vmatmul.mubr.f32.gmra.mrb[0].mxu0 %v131
    %v204 = vpop.f32.mrb[0].mxu0
    %v205 = vadd.f32 0.0, %v204
    %v206 = vpop.f32.mrb[0].mxu0
    %207 = vdwg.mxu0
    %210 = vrot.lane.b32.xlu0 %v200, 96
    %v211 = vpop.permute.xlu0 %210
    %212 = vrot.lane.b32.xlu0 %v205, 96
    %v213 = vpop.permute.xlu0 %212
    %vm214 = vcmask 64512
    %v215 = vsel %vm214, %v200, 0
    %v217 = vsel %vm214, %v205, 0
    %v219 = vsel %vm214, %v211, 0
    %v221 = vsel %vm214, %v213, 0
    %223 = vmatprep.subr.mxu0 0.0
    %224 = vmatpush1.xpose.msra.mxu0 %v219
    %225 = vmatprep.subr.mxu0 0.0
    %226 = vmatpush1.xpose.msra.mxu0 %v221
    %227 = vmatprep.subr.mxu0 0.0
    %228 = vmatpush1.xpose.msra.mxu0 0.0
    %229 = vmatprep.subr.mxu0 0.0
    %230 = vmatpush1.xpose.msra.mxu0 0.0
    %231 = vmatprep.subr.mxu0 0.0
    %232 = vmatpush1.xpose.msra.mxu0 0.0
    %233 = vmatprep.subr.mxu0 0.0
    %234 = vmatpush1.xpose.msra.mxu0 0.0
    %235 = vmatprep.subr.mxu0 0.0
    %236 = vmatpush1.xpose.msra.mxu0 0.0
    %237 = vmatprep.subr.mxu0 0.0
    %238 = vmatpush1.xpose.msra.mxu0 0.0
    %239 = vmatprep.subr.mxu0 0.0
    %240 = vmatpush1.xpose.msra.mxu0 0.0
    %241 = vmatprep.subr.mxu0 0.0
    %242 = vmatpush1.xpose.msra.mxu0 0.0
    %243 = vmatprep.subr.mxu0 0.0
    %244 = vmatpush1.xpose.msra.mxu0 0.0
    %245 = vmatprep.subr.mxu0 0.0
    %246 = vmatpush1.xpose.msra.mxu0 0.0
    %247 = vmatprep.subr.mxu0 0.0
    %248 = vmatpush1.xpose.msra.mxu0 0.0
    %249 = vmatprep.subr.mxu0 0.0
    %250 = vmatpush1.xpose.msra.mxu0 0.0
    %251 = vmatprep.subr.mxu0 0.0
    %252 = vmatpush1.xpose.msra.mxu0 0.0
    %253 = vmatprep.subr.mxu0 0.0
    %254 = vmatpush1.xpose.msra.mxu0 0.0
    %255 = vmatprep.subr.mxu0 0.0
    %256 = vmatpush1.xpose.msra.mxu0 0.0
    %257 = vmatprep.subr.mxu0 0.0
    %258 = vmatpush1.xpose.msra.mxu0 0.0
    %259 = vmatprep.subr.mxu0 0.0
    %260 = vmatpush1.xpose.msra.mxu0 0.0
    %261 = vmatprep.subr.mxu0 0.0
    %262 = vmatpush1.xpose.msra.mxu0 0.0
    %263 = vmatprep.subr.mxu0 0.0
    %264 = vmatpush1.xpose.msra.mxu0 0.0
    %265 = vmatprep.subr.mxu0 0.0
    %266 = vmatpush1.xpose.msra.mxu0 0.0
    %267 = vmatprep.subr.mxu0 0.0
    %268 = vmatpush1.xpose.msra.mxu0 0.0
    %269 = vmatprep.subr.mxu0 0.0
    %270 = vmatpush1.xpose.msra.mxu0 0.0
    %271 = vmatprep.subr.mxu0 0.0
    %272 = vmatpush1.xpose.msra.mxu0 0.0
    %273 = vmatprep.subr.mxu0 0.0
    %274 = vmatpush1.xpose.msra.mxu0 0.0
    %275 = vmatprep.subr.mxu0 0.0
    %276 = vmatpush1.xpose.msra.mxu0 0.0
    %277 = vmatprep.subr.mxu0 0.0
    %278 = vmatpush1.xpose.msra.mxu0 0.0
    %279 = vmatprep.subr.mxu0 0.0
    %280 = vmatpush1.xpose.msra.mxu0 0.0
    %281 = vmatprep.subr.mxu0 0.0
    %282 = vmatpush1.xpose.msra.mxu0 0.0
    %283 = vmatprep.subr.mxu0 0.0
    %284 = vmatpush1.xpose.msra.mxu0 0.0
    %285 = vmatprep.subr.mxu0 0.0
    %286 = vmatpush1.xpose.msra.mxu0 0.0
    %287 = vmatprep.mubr.f32.mxu0 0.0
    %288 = vmatmul.mubr.f32.gmra.mrb[0].mxu0 %v215
    %v289 = vpop.f32.mrb[0].mxu0
    %v290 = vadd.f32 %v74, %v289
    %v291 = vpop.f32.mrb[0].mxu0
    %292 = vmatprep.mubr.f32.mxu0 0.0
    %293 = vmatmul.mubr.f32.gmra.mrb[0].mxu0 %v217
    %v294 = vpop.f32.mrb[0].mxu0
    %v295 = vadd.f32 %v75, %v294
    %v296 = vpop.f32.mrb[0].mxu0
    %297 = vdwg.mxu0
    %vm298 = vcmask 130048
    %v299 = vsel %vm298, %v290, -inf
    %300 = vmax.xlane.f32.xlu0 %v299
    %v301 = vpop.xlane.xlu0 %300
    %v302 = vsel %vm298, %v295, -inf
    %303 = vmax.xlane.f32.xlu0 %v302
    %v304 = vpop.xlane.xlu0 %303
    %v305 = vsub.f32 %v290, %v301
    %v306 = vsub.f32 %v295, %v304
    %v307 = vmul.f32 %v305, 1.442695
    %v308 = vpow.pop %v307
    %v309 = vmul.f32 %v306, 1.442695
    %v310 = vpow.pop %v309
    %v311 = vsel %vm298, %v308, 0.0
    %312 = vadd.xlane.f32.xlu0 %v311
    %v313 = vpop.xlane.xlu0 %312
    %v314 = vsel %vm298, %v310, 0.0
    %315 = vadd.xlane.f32.xlu0 %v314
    %v316 = vpop.xlane.xlu0 %315
    %v317 = vrcp.pop %v313
    %v318 = vrcp.pop %v316
    %v319 = vmul.f32 %v308, %v317
    %v320 = vmul.f32 %v310, %v318
    %321 = vrot.lane.b32.xlu0 %v200, 64
    %v322 = vpop.permute.xlu0 %321
    %323 = vrot.lane.b32.xlu0 %v205, 64
    %v324 = vpop.permute.xlu0 %323
    %v328 = vsel %vm298, %v319, 0
    %v331 = vsel %vm298, %v320, 0
    %333 = vmatprep.subr.mxu0 0.0
    %334 = vmatpush1.msra.mxu0 %v322
    %335 = vmatprep.subr.mxu0 0.0
    %336 = vmatpush1.msra.mxu0 %v324
    %337 = vmatprep.subr.mxu0 0.0
    %338 = vmatpush1.msra.mxu0 0.0
    %339 = vmatprep.subr.mxu0 0.0
    %340 = vmatpush1.msra.mxu0 0.0
    %341 = vmatprep.subr.mxu0 0.0
    %342 = vmatpush1.msra.mxu0 0.0
    %343 = vmatprep.subr.mxu0 0.0
    %344 = vmatpush1.msra.mxu0 0.0
    %345 = vmatprep.subr.mxu0 0.0
    %346 = vmatpush1.msra.mxu0 0.0
    %347 = vmatprep.subr.mxu0 0.0
    %348 = vmatpush1.msra.mxu0 0.0
    %349 = vmatprep.subr.mxu0 0.0
    %350 = vmatpush1.msra.mxu0 0.0
    %351 = vmatprep.subr.mxu0 0.0
    %352 = vmatpush1.msra.mxu0 0.0
    %353 = vmatprep.subr.mxu0 0.0
    %354 = vmatpush1.msra.mxu0 0.0
    %355 = vmatprep.subr.mxu0 0.0
    %356 = vmatpush1.msra.mxu0 0.0
    %357 = vmatprep.subr.mxu0 0.0
    %358 = vmatpush1.msra.mxu0 0.0
    %359 = vmatprep.subr.mxu0 0.0
    %360 = vmatpush1.msra.mxu0 0.0
    %361 = vmatprep.subr.mxu0 0.0
    %362 = vmatpush1.msra.mxu0 0.0
    %363 = vmatprep.subr.mxu0 0.0
    %364 = vmatpush1.msra.mxu0 0.0
    %365 = vmatprep.subr.mxu0 0.0
    %366 = vmatpush1.msra.mxu0 0.0
    %367 = vmatprep.subr.mxu0 0.0
    %368 = vmatpush1.msra.mxu0 0.0
    %369 = vmatprep.subr.mxu0 0.0
    %370 = vmatpush1.msra.mxu0 0.0
    %371 = vmatprep.subr.mxu0 0.0
    %372 = vmatpush1.msra.mxu0 0.0
    %373 = vmatprep.subr.mxu0 0.0
    %374 = vmatpush1.msra.mxu0 0.0
    %375 = vmatprep.subr.mxu0 0.0
    %376 = vmatpush1.msra.mxu0 0.0
    %377 = vmatprep.subr.mxu0 0.0
    %378 = vmatpush1.msra.mxu0 0.0
    %379 = vmatprep.subr.mxu0 0.0
    %380 = vmatpush1.msra.mxu0 0.0
    %381 = vmatprep.subr.mxu0 0.0
    %382 = vmatpush1.msra.mxu0 0.0
    %383 = vmatprep.subr.mxu0 0.0
    %384 = vmatpush1.msra.mxu0 0.0
    %385 = vmatprep.subr.mxu0 0.0
    %386 = vmatpush1.msra.mxu0 0.0
    %387 = vmatprep.subr.mxu0 0.0
    %388 = vmatpush1.msra.mxu0 0.0
    %389 = vmatprep.subr.mxu0 0.0
    %390 = vmatpush1.msra.mxu0 0.0
    %391 = vmatprep.subr.mxu0 0.0
    %392 = vmatpush1.msra.mxu0 0.0
    %393 = vmatprep.subr.mxu0 0.0
    %394 = vmatpush1.msra.mxu0 0.0
    %395 = vmatprep.subr.mxu0 0.0
    %396 = vmatpush1.msra.mxu0 0.0
    %397 = vmatprep.mubr.f32.mxu0 0.0
    %398 = vmatmul.mubr.f32.gmra.mrb[0].mxu0 %v328
    %v399 = vpop.f32.mrb[0].mxu0
    %v400 = vadd.f32 0.0, %v399
    %v401 = vpop.f32.mrb[0].mxu0
    %402 = vmatprep.mubr.f32.mxu0 0.0
    %403 = vmatmul.mubr.f32.gmra.mrb[0].mxu0 %v331
    %v404 = vpop.f32.mrb[0].mxu0
    %v405 = vadd.f32 0.0, %v404
    %v406 = vpop.f32.mrb[0].mxu0
    %407 = vdwg.mxu0
    %408 = vrot.lane.b32.xlu0 %v200, 120
    %v409 = vpop.permute.xlu0 %408
    %410 = vrot.lane.b32.xlu0 %v205, 120
    %v411 = vpop.permute.xlu0 %410
    %412 = vrot.lane.b32.xlu0 %v200, 88
    %v413 = vpop.permute.xlu0 %412
    %414 = vrot.lane.b32.xlu0 %v205, 88
    %v415 = vpop.permute.xlu0 %414
    %v416 = vsel %vm214, %v409, 0
    %v418 = vsel %vm214, %v411, 0
    %v420 = vsel %vm214, %v413, 0
    %v422 = vsel %vm214, %v415, 0
    %424 = vmatprep.subr.mxu0 0.0
    %425 = vmatpush1.xpose.msra.mxu0 %v420
    %426 = vmatprep.subr.mxu0 0.0
    %427 = vmatpush1.xpose.msra.mxu0 %v422
    %428 = vmatprep.subr.mxu0 0.0
    %429 = vmatpush1.xpose.msra.mxu0 0.0
    %430 = vmatprep.subr.mxu0 0.0
    %431 = vmatpush1.xpose.msra.mxu0 0.0
    %432 = vmatprep.subr.mxu0 0.0
    %433 = vmatpush1.xpose.msra.mxu0 0.0
    %434 = vmatprep.subr.mxu0 0.0
    %435 = vmatpush1.xpose.msra.mxu0 0.0
    %436 = vmatprep.subr.mxu0 0.0
    %437 = vmatpush1.xpose.msra.mxu0 0.0
    %438 = vmatprep.subr.mxu0 0.0
    %439 = vmatpush1.xpose.msra.mxu0 0.0
    %440 = vmatprep.subr.mxu0 0.0
    %441 = vmatpush1.xpose.msra.mxu0 0.0
    %442 = vmatprep.subr.mxu0 0.0
    %443 = vmatpush1.xpose.msra.mxu0 0.0
    %444 = vmatprep.subr.mxu0 0.0
    %445 = vmatpush1.xpose.msra.mxu0 0.0
    %446 = vmatprep.subr.mxu0 0.0
    %447 = vmatpush1.xpose.msra.mxu0 0.0
    %448 = vmatprep.subr.mxu0 0.0
    %449 = vmatpush1.xpose.msra.mxu0 0.0
    %450 = vmatprep.subr.mxu0 0.0
    %451 = vmatpush1.xpose.msra.mxu0 0.0
    %452 = vmatprep.subr.mxu0 0.0
    %453 = vmatpush1.xpose.msra.mxu0 0.0
    %454 = vmatprep.subr.mxu0 0.0
    %455 = vmatpush1.xpose.msra.mxu0 0.0
    %456 = vmatprep.subr.mxu0 0.0
    %457 = vmatpush1.xpose.msra.mxu0 0.0
    %458 = vmatprep.subr.mxu0 0.0
    %459 = vmatpush1.xpose.msra.mxu0 0.0
    %460 = vmatprep.subr.mxu0 0.0
    %461 = vmatpush1.xpose.msra.mxu0 0.0
    %462 = vmatprep.subr.mxu0 0.0
    %463 = vmatpush1.xpose.msra.mxu0 0.0
    %464 = vmatprep.subr.mxu0 0.0
    %465 = vmatpush1.xpose.msra.mxu0 0.0
    %466 = vmatprep.subr.mxu0 0.0
    %467 = vmatpush1.xpose.msra.mxu0 0.0
    %468 = vmatprep.subr.mxu0 0.0
    %469 = vmatpush1.xpose.msra.mxu0 0.0
    %470 = vmatprep.subr.mxu0 0.0
    %471 = vmatpush1.xpose.msra.mxu0 0.0
    %472 = vmatprep.subr.mxu0 0.0
    %473 = vmatpush1.xpose.msra.mxu0 0.0
    %474 = vmatprep.subr.mxu0 0.0
    %475 = vmatpush1.xpose.msra.mxu0 0.0
    %476 = vmatprep.subr.mxu0 0.0
    %477 = vmatpush1.xpose.msra.mxu0 0.0
    %478 = vmatprep.subr.mxu0 0.0
    %479 = vmatpush1.xpose.msra.mxu0 0.0
    %480 = vmatprep.subr.mxu0 0.0
    %481 = vmatpush1.xpose.msra.mxu0 0.0
    %482 = vmatprep.subr.mxu0 0.0
    %483 = vmatpush1.xpose.msra.mxu0 0.0
    %484 = vmatprep.subr.mxu0 0.0
    %485 = vmatpush1.xpose.msra.mxu0 0.0
    %486 = vmatprep.subr.mxu0 0.0
    %487 = vmatpush1.xpose.msra.mxu0 0.0
    %488 = vmatprep.mubr.f32.mxu0 0.0
    %489 = vmatmul.mubr.f32.gmra.mrb[0].mxu0 %v416
    %v490 = vpop.f32.mrb[0].mxu0
    %v491 = vadd.f32 %v74, %v490
    %v492 = vpop.f32.mrb[0].mxu0
    %493 = vmatprep.mubr.f32.mxu0 0.0
    %494 = vmatmul.mubr.f32.gmra.mrb[0].mxu0 %v418
    %v495 = vpop.f32.mrb[0].mxu0
    %v496 = vadd.f32 %v75, %v495
    %v497 = vpop.f32.mrb[0].mxu0
    %498 = vdwg.mxu0
    %v499 = vsel %vm298, %v491, -inf
    %500 = vmax.xlane.f32.xlu0 %v499
    %v501 = vpop.xlane.xlu0 %500
    %v502 = vsel %vm298, %v496, -inf
    %503 = vmax.xlane.f32.xlu0 %v502
    %v504 = vpop.xlane.xlu0 %503
    %v505 = vsub.f32 %v491, %v501
    %v506 = vsub.f32 %v496, %v504
    %v507 = vmul.f32 %v505, 1.442695
    %v508 = vpow.pop %v507
    %v509 = vmul.f32 %v506, 1.442695
    %v510 = vpow.pop %v509
    %v511 = vsel %vm298, %v508, 0.0
    %512 = vadd.xlane.f32.xlu0 %v511
    %v513 = vpop.xlane.xlu0 %512
    %v514 = vsel %vm298, %v510, 0.0
    %515 = vadd.xlane.f32.xlu0 %v514
    %v516 = vpop.xlane.xlu0 %515
    %v517 = vrcp.pop %v513
    %v518 = vrcp.pop %v516
    %v519 = vmul.f32 %v508, %v517
    %v520 = vmul.f32 %v510, %v518
    %521 = vrot.lane.b32.xlu0 %v200, 56
    %v522 = vpop.permute.xlu0 %521
    %523 = vrot.lane.b32.xlu0 %v205, 56
    %v524 = vpop.permute.xlu0 %523
    %v528 = vsel %vm298, %v519, 0
    %v531 = vsel %vm298, %v520, 0
    %533 = vmatprep.subr.mxu0 0.0
    %534 = vmatpush1.msra.mxu0 %v522
    %535 = vmatprep.subr.mxu0 0.0
    %536 = vmatpush1.msra.mxu0 %v524
    %537 = vmatprep.subr.mxu0 0.0
    %538 = vmatpush1.msra.mxu0 0.0
    %539 = vmatprep.subr.mxu0 0.0
    %540 = vmatpush1.msra.mxu0 0.0
    %541 = vmatprep.subr.mxu0 0.0
    %542 = vmatpush1.msra.mxu0 0.0
    %543 = vmatprep.subr.mxu0 0.0
    %544 = vmatpush1.msra.mxu0 0.0
    %545 = vmatprep.subr.mxu0 0.0
    %546 = vmatpush1.msra.mxu0 0.0
    %547 = vmatprep.subr.mxu0 0.0
    %548 = vmatpush1.msra.mxu0 0.0
    %549 = vmatprep.subr.mxu0 0.0
    %550 = vmatpush1.msra.mxu0 0.0
    %551 = vmatprep.subr.mxu0 0.0
    %552 = vmatpush1.msra.mxu0 0.0
    %553 = vmatprep.subr.mxu0 0.0
    %554 = vmatpush1.msra.mxu0 0.0
    %555 = vmatprep.subr.mxu0 0.0
    %556 = vmatpush1.msra.mxu0 0.0
    %557 = vmatprep.subr.mxu0 0.0
    %558 = vmatpush1.msra.mxu0 0.0
    %559 = vmatprep.subr.mxu0 0.0
    %560 = vmatpush1.msra.mxu0 0.0
    %561 = vmatprep.subr.mxu0 0.0
    %562 = vmatpush1.msra.mxu0 0.0
    %563 = vmatprep.subr.mxu0 0.0
    %564 = vmatpush1.msra.mxu0 0.0
    %565 = vmatprep.subr.mxu0 0.0
    %566 = vmatpush1.msra.mxu0 0.0
    %567 = vmatprep.subr.mxu0 0.0
    %568 = vmatpush1.msra.mxu0 0.0
    %569 = vmatprep.subr.mxu0 0.0
    %570 = vmatpush1.msra.mxu0 0.0
    %571 = vmatprep.subr.mxu0 0.0
    %572 = vmatpush1.msra.mxu0 0.0
    %573 = vmatprep.subr.mxu0 0.0
    %574 = vmatpush1.msra.mxu0 0.0
    %575 = vmatprep.subr.mxu0 0.0
    %576 = vmatpush1.msra.mxu0 0.0
    %577 = vmatprep.subr.mxu0 0.0
    %578 = vmatpush1.msra.mxu0 0.0
    %579 = vmatprep.subr.mxu0 0.0
    %580 = vmatpush1.msra.mxu0 0.0
    %581 = vmatprep.subr.mxu0 0.0
    %582 = vmatpush1.msra.mxu0 0.0
    %583 = vmatprep.subr.mxu0 0.0
    %584 = vmatpush1.msra.mxu0 0.0
    %585 = vmatprep.subr.mxu0 0.0
    %586 = vmatpush1.msra.mxu0 0.0
    %587 = vmatprep.subr.mxu0 0.0
    %588 = vmatpush1.msra.mxu0 0.0
    %589 = vmatprep.subr.mxu0 0.0
    %590 = vmatpush1.msra.mxu0 0.0
    %591 = vmatprep.subr.mxu0 0.0
    %592 = vmatpush1.msra.mxu0 0.0
    %593 = vmatprep.subr.mxu0 0.0
    %594 = vmatpush1.msra.mxu0 0.0
    %595 = vmatprep.subr.mxu0 0.0
    %596 = vmatpush1.msra.mxu0 0.0
    %597 = vmatprep.mubr.f32.mxu0 0.0
    %598 = vmatmul.mubr.f32.gmra.mrb[0].mxu0 %v528
    %v599 = vpop.f32.mrb[0].mxu0
    %v600 = vadd.f32 0.0, %v599
    %v601 = vpop.f32.mrb[0].mxu0
    %602 = vmatprep.mubr.f32.mxu0 0.0
    %603 = vmatmul.mubr.f32.gmra.mrb[0].mxu0 %v531
    %v604 = vpop.f32.mrb[0].mxu0
    %v605 = vadd.f32 0.0, %v604
    %v606 = vpop.f32.mrb[0].mxu0
    %607 = vdwg.mxu0
    %608 = vrot.lane.b32.xlu0 %v200, 112
    %v609 = vpop.permute.xlu0 %608
    %610 = vrot.lane.b32.xlu0 %v205, 112
    %v611 = vpop.permute.xlu0 %610
    %612 = vrot.lane.b32.xlu0 %v200, 80
    %v613 = vpop.permute.xlu0 %612
    %614 = vrot.lane.b32.xlu0 %v205, 80
    %v615 = vpop.permute.xlu0 %614
    %v616 = vsel %vm214, %v609, 0
    %v618 = vsel %vm214, %v611, 0
    %v620 = vsel %vm214, %v613, 0
    %v622 = vsel %vm214, %v615, 0
    %624 = vmatprep.subr.mxu0 0.0
    %625 = vmatpush1.xpose.msra.mxu0 %v620
    %626 = vmatprep.subr.mxu0 0.0
    %627 = vmatpush1.xpose.msra.mxu0 %v622
    %628 = vmatprep.subr.mxu0 0.0
    %629 = vmatpush1.xpose.msra.mxu0 0.0
    %630 = vmatprep.subr.mxu0 0.0
    %631 = vmatpush1.xpose.msra.mxu0 0.0
    %632 = vmatprep.subr.mxu0 0.0
    %633 = vmatpush1.xpose.msra.mxu0 0.0
    %634 = vmatprep.subr.mxu0 0.0
    %635 = vmatpush1.xpose.msra.mxu0 0.0
    %636 = vmatprep.subr.mxu0 0.0
    %637 = vmatpush1.xpose.msra.mxu0 0.0
    %638 = vmatprep.subr.mxu0 0.0
    %639 = vmatpush1.xpose.msra.mxu0 0.0
    %640 = vmatprep.subr.mxu0 0.0
    %641 = vmatpush1.xpose.msra.mxu0 0.0
    %642 = vmatprep.subr.mxu0 0.0
    %643 = vmatpush1.xpose.msra.mxu0 0.0
    %644 = vmatprep.subr.mxu0 0.0
    %645 = vmatpush1.xpose.msra.mxu0 0.0
    %646 = vmatprep.subr.mxu0 0.0
    %647 = vmatpush1.xpose.msra.mxu0 0.0
    %648 = vmatprep.subr.mxu0 0.0
    %649 = vmatpush1.xpose.msra.mxu0 0.0
    %650 = vmatprep.subr.mxu0 0.0
    %651 = vmatpush1.xpose.msra.mxu0 0.0
    %652 = vmatprep.subr.mxu0 0.0
    %653 = vmatpush1.xpose.msra.mxu0 0.0
    %654 = vmatprep.subr.mxu0 0.0
    %655 = vmatpush1.xpose.msra.mxu0 0.0
    %656 = vmatprep.subr.mxu0 0.0
    %657 = vmatpush1.xpose.msra.mxu0 0.0
    %658 = vmatprep.subr.mxu0 0.0
    %659 = vmatpush1.xpose.msra.mxu0 0.0
    %660 = vmatprep.subr.mxu0 0.0
    %661 = vmatpush1.xpose.msra.mxu0 0.0
    %662 = vmatprep.subr.mxu0 0.0
    %663 = vmatpush1.xpose.msra.mxu0 0.0
    %664 = vmatprep.subr.mxu0 0.0
    %665 = vmatpush1.xpose.msra.mxu0 0.0
    %666 = vmatprep.subr.mxu0 0.0
    %667 = vmatpush1.xpose.msra.mxu0 0.0
    %668 = vmatprep.subr.mxu0 0.0
    %669 = vmatpush1.xpose.msra.mxu0 0.0
    %670 = vmatprep.subr.mxu0 0.0
    %671 = vmatpush1.xpose.msra.mxu0 0.0
    %672 = vmatprep.subr.mxu0 0.0
    %673 = vmatpush1.xpose.msra.mxu0 0.0
    %674 = vmatprep.subr.mxu0 0.0
    %675 = vmatpush1.xpose.msra.mxu0 0.0
    %676 = vmatprep.subr.mxu0 0.0
    %677 = vmatpush1.xpose.msra.mxu0 0.0
    %678 = vmatprep.subr.mxu0 0.0
    %679 = vmatpush1.xpose.msra.mxu0 0.0
    %680 = vmatprep.subr.mxu0 0.0
    %681 = vmatpush1.xpose.msra.mxu0 0.0
    %682 = vmatprep.subr.mxu0 0.0
    %683 = vmatpush1.xpose.msra.mxu0 0.0
    %684 = vmatprep.subr.mxu0 0.0
    %685 = vmatpush1.xpose.msra.mxu0 0.0
    %686 = vmatprep.subr.mxu0 0.0
    %687 = vmatpush1.xpose.msra.mxu0 0.0
    %688 = vmatprep.mubr.f32.mxu0 0.0
    %689 = vmatmul.mubr.f32.gmra.mrb[0].mxu0 %v616
    %v690 = vpop.f32.mrb[0].mxu0
    %v691 = vadd.f32 %v74, %v690
    %v692 = vpop.f32.mrb[0].mxu0
    %693 = vmatprep.mubr.f32.mxu0 0.0
    %694 = vmatmul.mubr.f32.gmra.mrb[0].mxu0 %v618
    %v695 = vpop.f32.mrb[0].mxu0
    %v696 = vadd.f32 %v75, %v695
    %v697 = vpop.f32.mrb[0].mxu0
    %698 = vdwg.mxu0
    %v699 = vsel %vm298, %v691, -inf
    %700 = vmax.xlane.f32.xlu0 %v699
    %v701 = vpop.xlane.xlu0 %700
    %v702 = vsel %vm298, %v696, -inf
    %703 = vmax.xlane.f32.xlu0 %v702
    %v704 = vpop.xlane.xlu0 %703
    %v705 = vsub.f32 %v691, %v701
    %v706 = vsub.f32 %v696, %v704
    %v707 = vmul.f32 %v705, 1.442695
    %v708 = vpow.pop %v707
    %v709 = vmul.f32 %v706, 1.442695
    %v710 = vpow.pop %v709
    %v711 = vsel %vm298, %v708, 0.0
    %712 = vadd.xlane.f32.xlu0 %v711
    %v713 = vpop.xlane.xlu0 %712
    %v714 = vsel %vm298, %v710, 0.0
    %715 = vadd.xlane.f32.xlu0 %v714
    %v716 = vpop.xlane.xlu0 %715
    %v717 = vrcp.pop %v713
    %v718 = vrcp.pop %v716
    %v719 = vmul.f32 %v708, %v717
    %v720 = vmul.f32 %v710, %v718
    %721 = vrot.lane.b32.xlu0 %v200, 48
    %v722 = vpop.permute.xlu0 %721
    %723 = vrot.lane.b32.xlu0 %v205, 48
    %v724 = vpop.permute.xlu0 %723
    %v728 = vsel %vm298, %v719, 0
    %v731 = vsel %vm298, %v720, 0
    %733 = vmatprep.subr.mxu0 0.0
    %734 = vmatpush1.msra.mxu0 %v722
    %735 = vmatprep.subr.mxu0 0.0
    %736 = vmatpush1.msra.mxu0 %v724
    %737 = vmatprep.subr.mxu0 0.0
    %738 = vmatpush1.msra.mxu0 0.0
    %739 = vmatprep.subr.mxu0 0.0
    %740 = vmatpush1.msra.mxu0 0.0
    %741 = vmatprep.subr.mxu0 0.0
    %742 = vmatpush1.msra.mxu0 0.0
    %743 = vmatprep.subr.mxu0 0.0
    %744 = vmatpush1.msra.mxu0 0.0
    %745 = vmatprep.subr.mxu0 0.0
    %746 = vmatpush1.msra.mxu0 0.0
    %747 = vmatprep.subr.mxu0 0.0
    %748 = vmatpush1.msra.mxu0 0.0
    %749 = vmatprep.subr.mxu0 0.0
    %750 = vmatpush1.msra.mxu0 0.0
    %751 = vmatprep.subr.mxu0 0.0
    %752 = vmatpush1.msra.mxu0 0.0
    %753 = vmatprep.subr.mxu0 0.0
    %754 = vmatpush1.msra.mxu0 0.0
    %755 = vmatprep.subr.mxu0 0.0
    %756 = vmatpush1.msra.mxu0 0.0
    %757 = vmatprep.subr.mxu0 0.0
    %758 = vmatpush1.msra.mxu0 0.0
    %759 = vmatprep.subr.mxu0 0.0
    %760 = vmatpush1.msra.mxu0 0.0
    %761 = vmatprep.subr.mxu0 0.0
    %762 = vmatpush1.msra.mxu0 0.0
    %763 = vmatprep.subr.mxu0 0.0
    %764 = vmatpush1.msra.mxu0 0.0
    %765 = vmatprep.subr.mxu0 0.0
    %766 = vmatpush1.msra.mxu0 0.0
    %767 = vmatprep.subr.mxu0 0.0
    %768 = vmatpush1.msra.mxu0 0.0
    %769 = vmatprep.subr.mxu0 0.0
    %770 = vmatpush1.msra.mxu0 0.0
    %771 = vmatprep.subr.mxu0 0.0
    %772 = vmatpush1.msra.mxu0 0.0
    %773 = vmatprep.subr.mxu0 0.0
    %774 = vmatpush1.msra.mxu0 0.0
    %775 = vmatprep.subr.mxu0 0.0
    %776 = vmatpush1.msra.mxu0 0.0
    %777 = vmatprep.subr.mxu0 0.0
    %778 = vmatpush1.msra.mxu0 0.0
    %779 = vmatprep.subr.mxu0 0.0
    %780 = vmatpush1.msra.mxu0 0.0
    %781 = vmatprep.subr.mxu0 0.0
    %782 = vmatpush1.msra.mxu0 0.0
    %783 = vmatprep.subr.mxu0 0.0
    %784 = vmatpush1.msra.mxu0 0.0
    %785 = vmatprep.subr.mxu0 0.0
    %786 = vmatpush1.msra.mxu0 0.0
    %787 = vmatprep.subr.mxu0 0.0
    %788 = vmatpush1.msra.mxu0 0.0
    %789 = vmatprep.subr.mxu0 0.0
    %790 = vmatpush1.msra.mxu0 0.0
    %791 = vmatprep.subr.mxu0 0.0
    %792 = vmatpush1.msra.mxu0 0.0
    %793 = vmatprep.subr.mxu0 0.0
    %794 = vmatpush1.msra.mxu0 0.0
    %795 = vmatprep.subr.mxu0 0.0
    %796 = vmatpush1.msra.mxu0 0.0
    %797 = vmatprep.mubr.f32.mxu0 0.0
    %798 = vmatmul.mubr.f32.gmra.mrb[0].mxu0 %v728
    %v799 = vpop.f32.mrb[0].mxu0
    %v800 = vadd.f32 0.0, %v799
    %v801 = vpop.f32.mrb[0].mxu0
    %802 = vmatprep.mubr.f32.mxu0 0.0
    %803 = vmatmul.mubr.f32.gmra.mrb[0].mxu0 %v731
    %v804 = vpop.f32.mrb[0].mxu0
    %v805 = vadd.f32 0.0, %v804
    %v806 = vpop.f32.mrb[0].mxu0
    %807 = vdwg.mxu0
    %808 = vrot.lane.b32.xlu0 %v200, 104
    %v809 = vpop.permute.xlu0 %808
    %810 = vrot.lane.b32.xlu0 %v205, 104
    %v811 = vpop.permute.xlu0 %810
    %812 = vrot.lane.b32.xlu0 %v200, 72
    %v813 = vpop.permute.xlu0 %812
    %814 = vrot.lane.b32.xlu0 %v205, 72
    %v815 = vpop.permute.xlu0 %814
    %v816 = vsel %vm214, %v809, 0
    %v818 = vsel %vm214, %v811, 0
    %v820 = vsel %vm214, %v813, 0
    %v822 = vsel %vm214, %v815, 0
    %824 = vmatprep.subr.mxu0 0.0
    %825 = vmatpush1.xpose.msra.mxu0 %v820
    %826 = vmatprep.subr.mxu0 0.0
    %827 = vmatpush1.xpose.msra.mxu0 %v822
    %828 = vmatprep.subr.mxu0 0.0
    %829 = vmatpush1.xpose.msra.mxu0 0.0
    %830 = vmatprep.subr.mxu0 0.0
    %831 = vmatpush1.xpose.msra.mxu0 0.0
    %832 = vmatprep.subr.mxu0 0.0
    %833 = vmatpush1.xpose.msra.mxu0 0.0
    %834 = vmatprep.subr.mxu0 0.0
    %835 = vmatpush1.xpose.msra.mxu0 0.0
    %836 = vmatprep.subr.mxu0 0.0
    %837 = vmatpush1.xpose.msra.mxu0 0.0
    %838 = vmatprep.subr.mxu0 0.0
    %839 = vmatpush1.xpose.msra.mxu0 0.0
    %840 = vmatprep.subr.mxu0 0.0
    %841 = vmatpush1.xpose.msra.mxu0 0.0
    %842 = vmatprep.subr.mxu0 0.0
    %843 = vmatpush1.xpose.msra.mxu0 0.0
    %844 = vmatprep.subr.mxu0 0.0
    %845 = vmatpush1.xpose.msra.mxu0 0.0
    %846 = vmatprep.subr.mxu0 0.0
    %847 = vmatpush1.xpose.msra.mxu0 0.0
    %848 = vmatprep.subr.mxu0 0.0
    %849 = vmatpush1.xpose.msra.mxu0 0.0
    %850 = vmatprep.subr.mxu0 0.0
    %851 = vmatpush1.xpose.msra.mxu0 0.0
    %852 = vmatprep.subr.mxu0 0.0
    %853 = vmatpush1.xpose.msra.mxu0 0.0
    %854 = vmatprep.subr.mxu0 0.0
    %855 = vmatpush1.xpose.msra.mxu0 0.0
    %856 = vmatprep.subr.mxu0 0.0
    %857 = vmatpush1.xpose.msra.mxu0 0.0
    %858 = vmatprep.subr.mxu0 0.0
    %859 = vmatpush1.xpose.msra.mxu0 0.0
    %860 = vmatprep.subr.mxu0 0.0
    %861 = vmatpush1.xpose.msra.mxu0 0.0
    %862 = vmatprep.subr.mxu0 0.0
    %863 = vmatpush1.xpose.msra.mxu0 0.0
    %864 = vmatprep.subr.mxu0 0.0
    %865 = vmatpush1.xpose.msra.mxu0 0.0
    %866 = vmatprep.subr.mxu0 0.0
    %867 = vmatpush1.xpose.msra.mxu0 0.0
    %868 = vmatprep.subr.mxu0 0.0
    %869 = vmatpush1.xpose.msra.mxu0 0.0
    %870 = vmatprep.subr.mxu0 0.0
    %871 = vmatpush1.xpose.msra.mxu0 0.0
    %872 = vmatprep.subr.mxu0 0.0
    %873 = vmatpush1.xpose.msra.mxu0 0.0
    %874 = vmatprep.subr.mxu0 0.0
    %875 = vmatpush1.xpose.msra.mxu0 0.0
    %876 = vmatprep.subr.mxu0 0.0
    %877 = vmatpush1.xpose.msra.mxu0 0.0
    %878 = vmatprep.subr.mxu0 0.0
    %879 = vmatpush1.xpose.msra.mxu0 0.0
    %880 = vmatprep.subr.mxu0 0.0
    %881 = vmatpush1.xpose.msra.mxu0 0.0
    %882 = vmatprep.subr.mxu0 0.0
    %883 = vmatpush1.xpose.msra.mxu0 0.0
    %884 = vmatprep.subr.mxu0 0.0
    %885 = vmatpush1.xpose.msra.mxu0 0.0
    %886 = vmatprep.subr.mxu0 0.0
    %887 = vmatpush1.xpose.msra.mxu0 0.0
    %888 = vmatprep.mubr.f32.mxu0 0.0
    %889 = vmatmul.mubr.f32.gmra.mrb[0].mxu0 %v816
    %v890 = vpop.f32.mrb[0].mxu0
    %v891 = vadd.f32 %v74, %v890
    %v892 = vpop.f32.mrb[0].mxu0
    %893 = vmatprep.mubr.f32.mxu0 0.0
    %894 = vmatmul.mubr.f32.gmra.mrb[0].mxu0 %v818
    %v895 = vpop.f32.mrb[0].mxu0
    %v896 = vadd.f32 %v75, %v895
    %v897 = vpop.f32.mrb[0].mxu0
    %898 = vdwg.mxu0
    %v899 = vsel %vm298, %v891, -inf
    %900 = vmax.xlane.f32.xlu0 %v899
    %v901 = vpop.xlane.xlu0 %900
    %v902 = vsel %vm298, %v896, -inf
    %903 = vmax.xlane.f32.xlu0 %v902
    %v904 = vpop.xlane.xlu0 %903
    %v905 = vsub.f32 %v891, %v901
    %v906 = vsub.f32 %v896, %v904
    %v907 = vmul.f32 %v905, 1.442695
    %v908 = vpow.pop %v907
    %v909 = vmul.f32 %v906, 1.442695
    %v910 = vpow.pop %v909
    %v911 = vsel %vm298, %v908, 0.0
    %912 = vadd.xlane.f32.xlu0 %v911
    %v913 = vpop.xlane.xlu0 %912
    %v914 = vsel %vm298, %v910, 0.0
    %915 = vadd.xlane.f32.xlu0 %v914
    %v916 = vpop.xlane.xlu0 %915
    %v917 = vrcp.pop %v913
    %v918 = vrcp.pop %v916
    %v919 = vmul.f32 %v908, %v917
    %v920 = vmul.f32 %v910, %v918
    %921 = vrot.lane.b32.xlu0 %v200, 40
    %v922 = vpop.permute.xlu0 %921
    %923 = vrot.lane.b32.xlu0 %v205, 40
    %v924 = vpop.permute.xlu0 %923
    %v928 = vsel %vm298, %v919, 0
    %v931 = vsel %vm298, %v920, 0
    %933 = vmatprep.subr.mxu0 0.0
    %934 = vmatpush1.msra.mxu0 %v922
    %935 = vmatprep.subr.mxu0 0.0
    %936 = vmatpush1.msra.mxu0 %v924
    %937 = vmatprep.subr.mxu0 0.0
    %938 = vmatpush1.msra.mxu0 0.0
    %939 = vmatprep.subr.mxu0 0.0
    %940 = vmatpush1.msra.mxu0 0.0
    %941 = vmatprep.subr.mxu0 0.0
    %942 = vmatpush1.msra.mxu0 0.0
    %943 = vmatprep.subr.mxu0 0.0
    %944 = vmatpush1.msra.mxu0 0.0
    %945 = vmatprep.subr.mxu0 0.0
    %946 = vmatpush1.msra.mxu0 0.0
    %947 = vmatprep.subr.mxu0 0.0
    %948 = vmatpush1.msra.mxu0 0.0
    %949 = vmatprep.subr.mxu0 0.0
    %950 = vmatpush1.msra.mxu0 0.0
    %951 = vmatprep.subr.mxu0 0.0
    %952 = vmatpush1.msra.mxu0 0.0
    %953 = vmatprep.subr.mxu0 0.0
    %954 = vmatpush1.msra.mxu0 0.0
    %955 = vmatprep.subr.mxu0 0.0
    %956 = vmatpush1.msra.mxu0 0.0
    %957 = vmatprep.subr.mxu0 0.0
    %958 = vmatpush1.msra.mxu0 0.0
    %959 = vmatprep.subr.mxu0 0.0
    %960 = vmatpush1.msra.mxu0 0.0
    %961 = vmatprep.subr.mxu0 0.0
    %962 = vmatpush1.msra.mxu0 0.0
    %963 = vmatprep.subr.mxu0 0.0
    %964 = vmatpush1.msra.mxu0 0.0
    %965 = vmatprep.subr.mxu0 0.0
    %966 = vmatpush1.msra.mxu0 0.0
    %967 = vmatprep.subr.mxu0 0.0
    %968 = vmatpush1.msra.mxu0 0.0
    %969 = vmatprep.subr.mxu0 0.0
    %970 = vmatpush1.msra.mxu0 0.0
    %971 = vmatprep.subr.mxu0 0.0
    %972 = vmatpush1.msra.mxu0 0.0
    %973 = vmatprep.subr.mxu0 0.0
    %974 = vmatpush1.msra.mxu0 0.0
    %975 = vmatprep.subr.mxu0 0.0
    %976 = vmatpush1.msra.mxu0 0.0
    %977 = vmatprep.subr.mxu0 0.0
    %978 = vmatpush1.msra.mxu0 0.0
    %979 = vmatprep.subr.mxu0 0.0
    %980 = vmatpush1.msra.mxu0 0.0
    %981 = vmatprep.subr.mxu0 0.0
    %982 = vmatpush1.msra.mxu0 0.0
    %983 = vmatprep.subr.mxu0 0.0
    %984 = vmatpush1.msra.mxu0 0.0
    %985 = vmatprep.subr.mxu0 0.0
    %986 = vmatpush1.msra.mxu0 0.0
    %987 = vmatprep.subr.mxu0 0.0
    %988 = vmatpush1.msra.mxu0 0.0
    %989 = vmatprep.subr.mxu0 0.0
    %990 = vmatpush1.msra.mxu0 0.0
    %991 = vmatprep.subr.mxu0 0.0
    %992 = vmatpush1.msra.mxu0 0.0
    %993 = vmatprep.subr.mxu0 0.0
    %994 = vmatpush1.msra.mxu0 0.0
    %995 = vmatprep.subr.mxu0 0.0
    %996 = vmatpush1.msra.mxu0 0.0
    %997 = vmatprep.mubr.f32.mxu0 0.0
    %998 = vmatmul.mubr.f32.gmra.mrb[0].mxu0 %v928
    %v999 = vpop.f32.mrb[0].mxu0
    %v1000 = vadd.f32 0.0, %v999
    %v1001 = vpop.f32.mrb[0].mxu0
    %1002 = vmatprep.mubr.f32.mxu0 0.0
    %1003 = vmatmul.mubr.f32.gmra.mrb[0].mxu0 %v931
    %v1004 = vpop.f32.mrb[0].mxu0
    %v1005 = vadd.f32 0.0, %v1004
    %v1006 = vpop.f32.mrb[0].mxu0
    %1007 = vdwg.mxu0
    %1010 = vrot.lane.b32.xlu0 %v600, 8
    %v1011 = vpop.permute.xlu0 %1010
    %1012 = vrot.lane.b32.xlu0 %v605, 8
    %v1013 = vpop.permute.xlu0 %1012
    %1018 = vrot.lane.b32.xlu0 %v800, 16
    %v1019 = vpop.permute.xlu0 %1018
    %1020 = vrot.lane.b32.xlu0 %v805, 16
    %v1021 = vpop.permute.xlu0 %1020
    %1026 = vrot.lane.b32.xlu0 %v1000, 24
    %v1027 = vpop.permute.xlu0 %1026
    %1028 = vrot.lane.b32.xlu0 %v1005, 24
    %v1029 = vpop.permute.xlu0 %1028
    %v1032 = vsel %vm214, %v400, %v1011
    %v1033 = vsel %vm214, %v405, %v1013
    %v1034 = vsel %vm298, %v1032, %v1019
    %v1035 = vsel %vm298, %v1033, %v1021
    %vm1036 = vcmask 195584
    %v1037 = vsel %vm1036, %v1034, %v1027
    %v1038 = vsel %vm1036, %v1035, %v1029
    %v1039 = vlaneseq
    %v1040 = vshrl.u32 %v1039, 7
    %v1041 = vsub.s32 0, %v1040
    %v1042 = vrot.slane %v78, %v1041
    %v1044 = vsel %vm83, %v1037, 0
    %v1047 = vsel %vm83, %v1038, 0
    %1049 = vmatprep.subr.mxu0 0.0
    %1050 = vmatpush1.msra.mxu0 %v58
    %1051 = vmatprep.subr.mxu0 0.0
    %1052 = vmatpush1.msra.mxu0 %v59
    %1053 = vmatprep.subr.mxu0 0.0
    %1054 = vmatpush1.msra.mxu0 %v60
    %1055 = vmatprep.subr.mxu0 0.0
    %1056 = vmatpush1.msra.mxu0 %v61
    %1057 = vmatprep.subr.mxu0 0.0
    %1058 = vmatpush1.msra.mxu0 0.0
    %1059 = vmatprep.subr.mxu0 0.0
    %1060 = vmatpush1.msra.mxu0 0.0
    %1061 = vmatprep.subr.mxu0 0.0
    %1062 = vmatpush1.msra.mxu0 0.0
    %1063 = vmatprep.subr.mxu0 0.0
    %1064 = vmatpush1.msra.mxu0 0.0
    %1065 = vmatprep.subr.mxu0 0.0
    %1066 = vmatpush1.msra.mxu0 0.0
    %1067 = vmatprep.subr.mxu0 0.0
    %1068 = vmatpush1.msra.mxu0 0.0
    %1069 = vmatprep.subr.mxu0 0.0
    %1070 = vmatpush1.msra.mxu0 0.0
    %1071 = vmatprep.subr.mxu0 0.0
    %1072 = vmatpush1.msra.mxu0 0.0
    %1073 = vmatprep.subr.mxu0 0.0
    %1074 = vmatpush1.msra.mxu0 0.0
    %1075 = vmatprep.subr.mxu0 0.0
    %1076 = vmatpush1.msra.mxu0 0.0
    %1077 = vmatprep.subr.mxu0 0.0
    %1078 = vmatpush1.msra.mxu0 0.0
    %1079 = vmatprep.subr.mxu0 0.0
    %1080 = vmatpush1.msra.mxu0 0.0
    %1081 = vmatprep.subr.mxu0 0.0
    %1082 = vmatpush1.msra.mxu0 0.0
    %1083 = vmatprep.subr.mxu0 0.0
    %1084 = vmatpush1.msra.mxu0 0.0
    %1085 = vmatprep.subr.mxu0 0.0
    %1086 = vmatpush1.msra.mxu0 0.0
    %1087 = vmatprep.subr.mxu0 0.0
    %1088 = vmatpush1.msra.mxu0 0.0
    %1089 = vmatprep.subr.mxu0 0.0
    %1090 = vmatpush1.msra.mxu0 0.0
    %1091 = vmatprep.subr.mxu0 0.0
    %1092 = vmatpush1.msra.mxu0 0.0
    %1093 = vmatprep.subr.mxu0 0.0
    %1094 = vmatpush1.msra.mxu0 0.0
    %1095 = vmatprep.subr.mxu0 0.0
    %1096 = vmatpush1.msra.mxu0 0.0
    %1097 = vmatprep.subr.mxu0 0.0
    %1098 = vmatpush1.msra.mxu0 0.0
    %1099 = vmatprep.subr.mxu0 0.0
    %1100 = vmatpush1.msra.mxu0 0.0
    %1101 = vmatprep.subr.mxu0 0.0
    %1102 = vmatpush1.msra.mxu0 0.0
    %1103 = vmatprep.subr.mxu0 0.0
    %1104 = vmatpush1.msra.mxu0 0.0
    %1105 = vmatprep.subr.mxu0 0.0
    %1106 = vmatpush1.msra.mxu0 0.0
    %1107 = vmatprep.subr.mxu0 0.0
    %1108 = vmatpush1.msra.mxu0 0.0
    %1109 = vmatprep.subr.mxu0 0.0
    %1110 = vmatpush1.msra.mxu0 0.0
    %1111 = vmatprep.subr.mxu0 0.0
    %1112 = vmatpush1.msra.mxu0 0.0
    %1113 = vmatprep.mubr.f32.mxu0 0.0
    %1114 = vmatmul.mubr.f32.gmra.mrb[0].mxu0 %v1044
    %v1115 = vpop.f32.mrb[0].mxu0
    %v1116 = vadd.f32 %v1042, %v1115
    %v1117 = vpop.f32.mrb[0].mxu0
    %1118 = vmatprep.mubr.f32.mxu0 0.0
    %1119 = vmatmul.mubr.f32.gmra.mrb[0].mxu0 %v1047
    %v1120 = vpop.f32.mrb[0].mxu0
    %v1121 = vadd.f32 %v1042, %v1120
    %v1122 = vpop.f32.mrb[0].mxu0
    %1123 = vdwg.mxu0
    %v1124 = vadd.f32 %v56, %v1116
    %v1125 = vadd.f32 %v57, %v1121
    %v1126 = vsel %vm83, %v1124, 0.0
    %1127 = vadd.xlane.f32.xlu0 %v1126
    %v1128 = vpop.xlane.xlu0 %1127
    %v1129 = vsel %vm83, %v1125, 0.0
    %1130 = vadd.xlane.f32.xlu0 %v1129
    %v1131 = vpop.xlane.xlu0 %1130
    %v1132 = vmul.f32 %v1128, %v90
    %v1133 = vmul.f32 %v1131, %v90
    %v1134 = vsub.f32 %v1124, %v1132
    %v1135 = vsub.f32 %v1125, %v1133
    %v1136 = vmul.f32 %v1134, %v1134
    %v1137 = vmul.f32 %v1135, %v1135
    %v1138 = vsel %vm83, %v1136, 0.0
    %1139 = vadd.xlane.f32.xlu0 %v1138
    %v1140 = vpop.xlane.xlu0 %1139
    %v1141 = vsel %vm83, %v1137, 0.0
    %1142 = vadd.xlane.f32.xlu0 %v1141
    %v1143 = vpop.xlane.xlu0 %1142
    %v1144 = vmul.f32 %v1140, %v90
    %v1145 = vmul.f32 %v1143, %v90
    %v1146 = vadd.f32 %v1144, 1e-05
    %v1147 = vadd.f32 %v1145, 1e-05
    %v1148 = vrsqrt.pop %v1146
    %v1149 = vrsqrt.pop %v1147
    %v1150 = vmul.f32 %v1134, %v1148
    %v1151 = vmul.f32 %v1135, %v1149
    %v1152 = vlaneseq
    %v1153 = vshrl.u32 %v1152, 7
    %v1154 = vsub.s32 0, %v1153
    %v1155 = vrot.slane %v79, %v1154
    %v1156 = vmul.f32 %v1150, %v1155
    %v1157 = vmul.f32 %v1151, %v1155
    %v1158 = vlaneseq
    %v1159 = vshrl.u32 %v1158, 7
    %v1160 = vsub.s32 0, %v1159
    %v1161 = vrot.slane %v80, %v1160
    %v1162 = vadd.f32 %v1156, %v1161
    %v1163 = vadd.f32 %v1157, %v1161
    %v1164 = vlaneseq
    %v1165 = vshrl.u32 %v1164, 7
    %v1166 = vsub.s32 0, %v1165
    %v1167 = vrot.slane %v82, %v1166
    %v1169 = vsel %vm83, %v1162, 0
    %v1172 = vsel %vm83, %v1163, 0
    %1174 = vmatprep.subr.mxu0 0.0
    %1175 = vmatpush1.msra.mxu0 %v62
    %1176 = vmatprep.subr.mxu0 0.0
    %1177 = vmatpush1.msra.mxu0 %v63
    %1178 = vmatprep.subr.mxu0 0.0
    %1179 = vmatpush1.msra.mxu0 %v64
    %1180 = vmatprep.subr.mxu0 0.0
    %1181 = vmatpush1.msra.mxu0 %v65
    %1182 = vmatprep.subr.mxu0 0.0
    %1183 = vmatpush1.msra.mxu0 0.0
    %1184 = vmatprep.subr.mxu0 0.0
    %1185 = vmatpush1.msra.mxu0 0.0
    %1186 = vmatprep.subr.mxu0 0.0
    %1187 = vmatpush1.msra.mxu0 0.0
    %1188 = vmatprep.subr.mxu0 0.0
    %1189 = vmatpush1.msra.mxu0 0.0
    %1190 = vmatprep.subr.mxu0 0.0
    %1191 = vmatpush1.msra.mxu0 0.0
    %1192 = vmatprep.subr.mxu0 0.0
    %1193 = vmatpush1.msra.mxu0 0.0
    %1194 = vmatprep.subr.mxu0 0.0
    %1195 = vmatpush1.msra.mxu0 0.0
    %1196 = vmatprep.subr.mxu0 0.0
    %1197 = vmatpush1.msra.mxu0 0.0
    %1198 = vmatprep.subr.mxu0 0.0
    %1199 = vmatpush1.msra.mxu0 0.0
    %1200 = vmatprep.subr.mxu0 0.0
    %1201 = vmatpush1.msra.mxu0 0.0
    %1202 = vmatprep.subr.mxu0 0.0
    %1203 = vmatpush1.msra.mxu0 0.0
    %1204 = vmatprep.subr.mxu0 0.0
    %1205 = vmatpush1.msra.mxu0 0.0
    %1206 = vmatprep.subr.mxu0 0.0
    %1207 = vmatpush1.msra.mxu0 0.0
    %1208 = vmatprep.subr.mxu0 0.0
    %1209 = vmatpush1.msra.mxu0 0.0
    %1210 = vmatprep.subr.mxu0 0.0
    %1211 = vmatpush1.msra.mxu0 0.0
    %1212 = vmatprep.subr.mxu0 0.0
    %1213 = vmatpush1.msra.mxu0 0.0
    %1214 = vmatprep.subr.mxu0 0.0
    %1215 = vmatpush1.msra.mxu0 0.0
    %1216 = vmatprep.subr.mxu0 0.0
    %1217 = vmatpush1.msra.mxu0 0.0
    %1218 = vmatprep.subr.mxu0 0.0
    %1219 = vmatpush1.msra.mxu0 0.0
    %1220 = vmatprep.subr.mxu0 0.0
    %1221 = vmatpush1.msra.mxu0 0.0
    %1222 = vmatprep.subr.mxu0 0.0
    %1223 = vmatpush1.msra.mxu0 0.0
    %1224 = vmatprep.subr.mxu0 0.0
    %1225 = vmatpush1.msra.mxu0 0.0
    %1226 = vmatprep.subr.mxu0 0.0
    %1227 = vmatpush1.msra.mxu0 0.0
    %1228 = vmatprep.subr.mxu0 0.0
    %1229 = vmatpush1.msra.mxu0 0.0
    %1230 = vmatprep.subr.mxu0 0.0
    %1231 = vmatpush1.msra.mxu0 0.0
    %1232 = vmatprep.subr.mxu0 0.0
    %1233 = vmatpush1.msra.mxu0 0.0
    %1234 = vmatprep.subr.mxu0 0.0
    %1235 = vmatpush1.msra.mxu0 0.0
    %1236 = vmatprep.subr.mxu0 0.0
    %1237 = vmatpush1.msra.mxu0 0.0
    %1238 = vmatprep.mubr.f32.mxu0 0.0
    %1239 = vmatmul.mubr.f32.gmra.mrb[0].mxu0 %v1169
    %v1240 = vpop.f32.mrb[0].mxu0
    %v1241 = vadd.f32 %v1167, %v1240
    %v1242 = vpop.f32.mrb[0].mxu0
    %1243 = vmatprep.mubr.f32.mxu0 0.0
    %1244 = vmatmul.mubr.f32.gmra.mrb[0].mxu0 %v1172
    %v1245 = vpop.f32.mrb[0].mxu0
    %v1246 = vadd.f32 %v1167, %v1245
    %v1247 = vpop.f32.mrb[0].mxu0
    %1248 = vdwg.mxu0
    %v1249 = vmul.f32 %v1241, 0.5
    %v1250 = vmul.f32 %v1246, 0.5
    %v1251 = vrcp.pop 1.4142135
    %v1252 = vmul.f32 %v1241, %v1251
    %v1253 = vmul.f32 %v1246, %v1251
    %v1254 = verf.f32.pop %v1252
    %v1255 = verf.f32.pop %v1253
    %v1256 = vadd.f32 %v1254, 1.0
    %v1257 = vadd.f32 %v1255, 1.0
    %v1258 = vmul.f32 %v1249, %v1256
    %v1259 = vmul.f32 %v1250, %v1257
    %v1260 = vlaneseq
    %v1261 = vshrl.u32 %v1260, 7
    %v1262 = vsub.s32 0, %v1261
    %v1263 = vrot.slane %v81, %v1262
    %vm1264 = vcmask 523264
    %v1266 = vsel %vm1264, %v1258, 0
    %v1269 = vsel %vm1264, %v1259, 0
    %1271 = vmatprep.subr.mxu0 0.0
    %1272 = vmatpush1.msra.mxu0 %v66
    %1273 = vmatprep.subr.mxu0 0.0
    %1274 = vmatpush1.msra.mxu0 %v67
    %1275 = vmatprep.subr.mxu0 0.0
    %1276 = vmatpush1.msra.mxu0 %v68
    %1277 = vmatprep.subr.mxu0 0.0
    %1278 = vmatpush1.msra.mxu0 %v69
    %1279 = vmatprep.subr.mxu0 0.0
    %1280 = vmatpush1.msra.mxu0 %v70
    %1281 = vmatprep.subr.mxu0 0.0
    %1282 = vmatpush1.msra.mxu0 %v71
    %1283 = vmatprep.subr.mxu0 0.0
    %1284 = vmatpush1.msra.mxu0 %v72
    %1285 = vmatprep.subr.mxu0 0.0
    %1286 = vmatpush1.msra.mxu0 %v73
    %1287 = vmatprep.subr.mxu0 0.0
    %1288 = vmatpush1.msra.mxu0 0.0
    %1289 = vmatprep.subr.mxu0 0.0
    %1290 = vmatpush1.msra.mxu0 0.0
    %1291 = vmatprep.subr.mxu0 0.0
    %1292 = vmatpush1.msra.mxu0 0.0
    %1293 = vmatprep.subr.mxu0 0.0
    %1294 = vmatpush1.msra.mxu0 0.0
    %1295 = vmatprep.subr.mxu0 0.0
    %1296 = vmatpush1.msra.mxu0 0.0
    %1297 = vmatprep.subr.mxu0 0.0
    %1298 = vmatpush1.msra.mxu0 0.0
    %1299 = vmatprep.subr.mxu0 0.0
    %1300 = vmatpush1.msra.mxu0 0.0
    %1301 = vmatprep.subr.mxu0 0.0
    %1302 = vmatpush1.msra.mxu0 0.0
    %1303 = vmatprep.subr.mxu0 0.0
    %1304 = vmatpush1.msra.mxu0 0.0
    %1305 = vmatprep.subr.mxu0 0.0
    %1306 = vmatpush1.msra.mxu0 0.0
    %1307 = vmatprep.subr.mxu0 0.0
    %1308 = vmatpush1.msra.mxu0 0.0
    %1309 = vmatprep.subr.mxu0 0.0
    %1310 = vmatpush1.msra.mxu0 0.0
    %1311 = vmatprep.subr.mxu0 0.0
    %1312 = vmatpush1.msra.mxu0 0.0
    %1313 = vmatprep.subr.mxu0 0.0
    %1314 = vmatpush1.msra.mxu0 0.0
    %1315 = vmatprep.subr.mxu0 0.0
    %1316 = vmatpush1.msra.mxu0 0.0
    %1317 = vmatprep.subr.mxu0 0.0
    %1318 = vmatpush1.msra.mxu0 0.0
    %1319 = vmatprep.subr.mxu0 0.0
    %1320 = vmatpush1.msra.mxu0 0.0
    %1321 = vmatprep.subr.mxu0 0.0
    %1322 = vmatpush1.msra.mxu0 0.0
    %1323 = vmatprep.subr.mxu0 0.0
    %1324 = vmatpush1.msra.mxu0 0.0
    %1325 = vmatprep.subr.mxu0 0.0
    %1326 = vmatpush1.msra.mxu0 0.0
    %1327 = vmatprep.subr.mxu0 0.0
    %1328 = vmatpush1.msra.mxu0 0.0
    %1329 = vmatprep.subr.mxu0 0.0
    %1330 = vmatpush1.msra.mxu0 0.0
    %1331 = vmatprep.subr.mxu0 0.0
    %1332 = vmatpush1.msra.mxu0 0.0
    %1333 = vmatprep.subr.mxu0 0.0
    %1334 = vmatpush1.msra.mxu0 0.0
    %1335 = vmatprep.mubr.f32.mxu0 0.0
    %1336 = vmatmul.mubr.f32.gmra.mrb[0].mxu0 %v1266
    %v1337 = vpop.f32.mrb[0].mxu0
    %v1338 = vadd.f32 %v1263, %v1337
    %v1339 = vpop.f32.mrb[0].mxu0
    %1340 = vmatprep.mubr.f32.mxu0 0.0
    %1341 = vmatmul.mubr.f32.gmra.mrb[0].mxu0 %v1269
    %v1342 = vpop.f32.mrb[0].mxu0
    %v1343 = vadd.f32 %v1263, %v1342
    %v1344 = vpop.f32.mrb[0].mxu0
    %1345 = vdwg.mxu0
    %v1346 = vadd.f32 %v1124, %v1338
    %v1347 = vadd.f32 %v1125, %v1343
    %1348 = vst.msk [vmem:[#allocation8] sm:$0xff] %vm83, %v1346
    %1349 = vst.msk [vmem:[#allocation8 + $0x8] sm:$0xff] %vm83, %v1347
    // Predicated region
    $region26: #{tpu_custom_call.1} parent=1 // pred_check
      _
    $region27: #{tpu_custom_call.1} parent=1 // pred_check_branch
      %1351 = sbr.rel (0) target = $region29
    $region28: #{tpu_custom_call.1} parent=1 // pred_region
      %s1353 = ssub.s32 256, 256
      %1354 = vsyncadd [#allocation4], %s1353
      %s1355 = sshll.u32 [#allocation8], 4
      %s1356 = int_to_ptr.vmem [resolvable:$true] %s1355
      %1361 = dma.vmem_to_hbm [thread:$0]  %s1356, 256, %s3, [#allocation4], 128, 128, 8
    $region29: #{tpu_custom_call.1} parent=1 // pred_fallthru
      _
    // Predicated region
    $region30: #{tpu_custom_call.1} parent=1 // pred_check
      _
    $region31: #{tpu_custom_call.1} parent=1 // pred_check_branch
      %1363 = sbr.rel (0) target = $region33
    $region32: #{tpu_custom_call.1} parent=1 // pred_region
      %1364 = dma.done [#allocation4], 256
    $region33: #{tpu_custom_call.1} parent=1 // pred_fallthru
      _
    %1365 = vsyncpa [#allocation3], 1
    %1366 = vsyncpa [#allocation6], 1
    %1367 = vsyncpa [#allocation4], 1

</llo_original>
